<compile_context>
chip_gen: v7x
topology: tpu7x:2x2x1
jax: 0.10.0
libtpu: 0.0.40
codegen_flags: <defaults>
</compile_context>

<pallas_src>
import functools
from typing import NamedTuple

import numpy as np
import jax
import jax.numpy as jnp
from jax.experimental import pallas as pl
from jax.experimental.pallas import tpu as pltpu


def _round_up(x, m):
    return (x + m - 1) // m * m


def _pad2(x, rows, cols):
    return jnp.pad(x, ((0, rows - x.shape[0]), (0, cols - x.shape[1])))


class TwoImagesMeta(NamedTuple):
    flat_dim: int
    n_out: int


_VMEM_BUDGET = None


def _vmem_budget_bytes():
    """~70% of physical VMEM, queried once (fallback = v7x's 64 MiB, the smallest part)."""
    global _VMEM_BUDGET
    if _VMEM_BUDGET is None:
        physical = 64 * 1024 * 1024
        try:
            info = pltpu.get_tpu_info()
            physical = int(getattr(info, "vmem_capacity_bytes", physical))
        except Exception:
            pass
        _VMEM_BUDGET = int(physical * 7 // 10)
    return _VMEM_BUDGET


# ----------------------------------------------------------------------------- kernels


def _epilogue(accA, accB, bf_ref, wfc_ref, bfc_ref, w1_ref, b1_ref, w2_ref, b2_ref, out_ref):
    bf16 = jnp.bfloat16
    # synthetic backbone head: bias + ReLU (padded feature lanes stay exactly 0)
    featA = jnp.maximum(accA + bf_ref[0], 0.0).astype(bf16)
    featB = jnp.maximum(accB + bf_ref[1], 0.0).astype(bf16)
    # replaced fc: num_ftrs -> 256 per branch
    xA = jnp.dot(featA, wfc_ref[0], preferred_element_type=jnp.float32) + bfc_ref[0]
    xB = jnp.dot(featB, wfc_ref[1], preferred_element_type=jnp.float32) + bfc_ref[1]
    # classifier Linear(512, HU) on concat([xA, xB]) == xA @ W1[:256] + xB @ W1[256:]
    h = (jnp.dot(xA.astype(bf16), w1_ref[0], preferred_element_type=jnp.float32)
         + jnp.dot(xB.astype(bf16), w1_ref[1], preferred_element_type=jnp.float32)
         + b1_ref[...])
    h = jnp.where(h > 0, h, 0.01 * h)          # nn.LeakyReLU default negative_slope = 0.01
    out = jnp.dot(h.astype(bf16), w2_ref[...],
                  preferred_element_type=jnp.float32) + b2_ref[...]
    out_ref[...] = out.astype(out_ref.dtype)


def _kernel_single_k(imgA_ref, imgB_ref, wf_ref, bf_ref, wfc_ref, bfc_ref,
                     w1_ref, b1_ref, w2_ref, b2_ref, out_ref):
    # flat_dim fits one K tile: no scratch accumulator, dot results feed the epilogue directly.
    bf16 = jnp.bfloat16
    accA = jnp.dot(imgA_ref[...].astype(bf16), wf_ref[0], preferred_element_type=jnp.float32)
    accB = jnp.dot(imgB_ref[...].astype(bf16), wf_ref[1], preferred_element_type=jnp.float32)
    _epilogue(accA, accB, bf_ref, wfc_ref, bfc_ref, w1_ref, b1_ref, w2_ref, b2_ref, out_ref)


def _kernel_multi_k(imgA_ref, imgB_ref, wf_ref, bf_ref, wfc_ref, bfc_ref,
                    w1_ref, b1_ref, w2_ref, b2_ref, out_ref, accA_ref, accB_ref):
    k = pl.program_id(1)
    bf16 = jnp.bfloat16

    @pl.when(k == 0)
    def _():
        accA_ref[...] = jnp.zeros_like(accA_ref)
        accB_ref[...] = jnp.zeros_like(accB_ref)

    # Backbone matmuls, K-tiled: bf16 MXU inputs (cast in-kernel), f32 accumulation.
    accA_ref[...] += jnp.dot(imgA_ref[...].astype(bf16), wf_ref[0],
                             preferred_element_type=jnp.float32)
    accB_ref[...] += jnp.dot(imgB_ref[...].astype(bf16), wf_ref[1],
                             preferred_element_type=jnp.float32)

    @pl.when(k == pl.num_programs(1) - 1)
    def _():
        _epilogue(accA_ref[...], accB_ref[...], bf_ref, wfc_ref, bfc_ref,
                  w1_ref, b1_ref, w2_ref, b2_ref, out_ref)


# ----------------------------------------------------------------- one-time weight prep


def prepare_two_images_params(params):
    """One-time weight formatting (pad to lane multiples, stack branches, cast to bf16).

    Call once and reuse across forward calls; keeps the per-call path free of weight
    padding / casting round-trips.  Zero padding is preserved everywhere so padded
    NF/HU/NO lanes stay exactly 0 through ReLU / LeakyReLU.
    """
    (wfA, bfA, wA, bA, wfB, bfB, wB, bB, w1, b1, w2, b2) = params
    f32, bf16 = jnp.float32, jnp.bfloat16

    flat_dim = wfA.shape[0]
    nf = max(wfA.shape[1], wfB.shape[1])
    hidden = w1.shape[1]
    n_out = w2.shape[1]

    KP = _round_up(flat_dim, 128)
    NF = _round_up(nf, 128)
    HU = _round_up(hidden, 128)
    NO = _round_up(n_out, 128)

    wf = jnp.stack([_pad2(wfA, KP, NF), _pad2(wfB, KP, NF)]).astype(bf16)     # (2, KP, NF)
    bf = jnp.stack([_pad2(bfA, 1, NF), _pad2(bfB, 1, NF)]).astype(f32)        # (2, 1, NF)
    wfc = jnp.stack([_pad2(wA, NF, 256), _pad2(wB, NF, 256)]).astype(bf16)    # (2, NF, 256)
    bfc = jnp.stack([bA, bB]).astype(f32)                                     # (2, 1, 256)
    w1s = jnp.stack([_pad2(w1[:256], 256, HU),
                     _pad2(w1[256:], 256, HU)]).astype(bf16)                  # (2, 256, HU)
    b1p = _pad2(b1, 1, HU).astype(f32)                                        # (1, HU)
    w2p = _pad2(w2, HU, NO).astype(bf16)                                      # (HU, NO)
    b2p = _pad2(b2, 1, NO).astype(f32)                                        # (1, NO)

    arrays = tuple(jax.block_until_ready(a)
                   for a in (wf, bf, wfc, bfc, w1s, b1p, w2p, b2p))
    meta = TwoImagesMeta(flat_dim=int(flat_dim), n_out=int(n_out))
    return arrays, meta


# --------------------------------------------------------------------------- tile sizing


def _choose_tiles(B, KP, NF, HU, NO, tk_max, tm_cap, buffers, budget):
    # Resident (constant-index) operands, charged at default double-buffering.
    resident = 2 * ((2 * NF + 2 * 256 + HU + NO) * 4
                    + (2 * NF * 256 + 2 * 256 * HU + HU * NO) * 2)

    # Batch tile: single M tile whenever the f32 accumulators fit the budget, so the
    # backbone weights are streamed exactly once per call (no re-streaming per M tile).
    acc_budget = min(12 * 1024 * 1024, budget // 3)
    tm_fit = max(8, (acc_budget // (2 * NF * 4)) // 8 * 8)
    if B <= min(tm_cap, tm_fit):
        TM, MP = B, B
    else:
        TM = max(8, min(tm_cap, tm_fit) // 8 * 8)
        MP = _round_up(B, TM)
    n_m = MP // TM

    fixed = resident + 2 * TM * NF * 4 + 2 * TM * NO * 4      # accumulators + output

    # K tile: largest lane multiple that divides KP (fast path needs no K padding) and
    # still fits the VMEM budget with the deepest buffering available.
    k_units = KP // 128
    all_divs = [d for d in range(k_units, 0, -1) if k_units % d == 0]
    divs = [d for d in all_divs if 128 * d <= tk_max] or [all_divs[-1]]

    for d in divs:
        TK = 128 * d
        n_k = KP // TK
        for nb in range(max(2, min(buffers, n_k)), 1, -1):
            streamed = nb * (2 * TM * TK * 4 + 2 * TK * NF * 2)   # f32 imgs + bf16 wf tiles
            if fixed + streamed <= budget:
                return TM, MP, n_m, TK, n_k, nb, fixed + streamed
    TK = 128 * divs[-1]
    n_k = KP // TK
    nb = 2
    streamed = nb * (2 * TM * TK * 4 + 2 * TK * NF * 2)
    return TM, MP, n_m, TK, n_k, nb, fixed + streamed


# ------------------------------------------------------------------------------- forward


@functools.partial(jax.jit, static_argnums=(2, 3, 4, 5, 6))
def _two_images_forward_impl(imgs, arrays, meta, tk_max, tm_cap, buffers, vmem_budget):
    wf, bf, wfc, bfc, w1s, b1p, w2p, b2p = arrays
    f32 = jnp.float32

    B = imgs.shape[0]
    flat_dim = int(np.prod(imgs.shape[2:]))
    if flat_dim != meta.flat_dim:
        raise ValueError("imgs flat dim does not match the prepared parameters")
    KP, NF = wf.shape[1], wf.shape[2]
    HU = w1s.shape[2]
    NO = w2p.shape[1]

    TM, MP, n_m, TK, n_k, n_buf, vmem_est = _choose_tiles(
        B, KP, NF, HU, NO, tk_max, tm_cap, buffers, vmem_budget)
    vmem_limit = int(max(vmem_budget, vmem_est + 4 * 1024 * 1024))

    # Activations: free (layout-preserving) reshape to (B, 2*flat_dim) f32.  Branch A
    # occupies columns [0, KP) and branch B [KP, 2*KP).  Only copy (pad) when K is not
    # lane-aligned or the batch needs multiple M tiles.
    if KP == flat_dim and MP == B:
        imgs2d = imgs.reshape(B, 2 * flat_dim)
    else:
        x = imgs.reshape(B, 2, flat_dim)
        x = jnp.pad(x, ((0, MP - B), (0, 0), (0, KP - flat_dim)))
        imgs2d = x.reshape(MP, 2 * KP)

    in_specs = [
        pl.BlockSpec((TM, TK), lambda m, k: (m, k),
                     pipeline_mode=pl.Buffered(n_buf)),                      # imgs branch A
        pl.BlockSpec((TM, TK), lambda m, k: (m, n_k + k),
                     pipeline_mode=pl.Buffered(n_buf)),                      # imgs branch B
        pl.BlockSpec((2, TK, NF), lambda m, k: (0, k, 0),
                     pipeline_mode=pl.Buffered(n_buf)),                      # wf (streamed)
        pl.BlockSpec((2, 1, NF), lambda m, k: (0, 0, 0)),                    # bf   (resident)
        pl.BlockSpec((2, NF, 256), lambda m, k: (0, 0, 0)),                  # wfc  (resident)
        pl.BlockSpec((2, 1, 256), lambda m, k: (0, 0, 0)),                   # bfc  (resident)
        pl.BlockSpec((2, 256, HU), lambda m, k: (0, 0, 0)),                  # w1   (resident)
        pl.BlockSpec((1, HU), lambda m, k: (0, 0)),                          # b1   (resident)
        pl.BlockSpec((HU, NO), lambda m, k: (0, 0)),                         # w2   (resident)
        pl.BlockSpec((1, NO), lambda m, k: (0, 0)),                          # b2   (resident)
    ]
    out_spec = pl.BlockSpec((TM, NO), lambda m, k: (m, 0))

    if n_k == 1:
        kernel = _kernel_single_k
        scratch = []
    else:
        kernel = _kernel_multi_k
        scratch = [pltpu.VMEM((TM, NF), f32), pltpu.VMEM((TM, NF), f32)]

    out = pl.pallas_call(
        kernel,
        out_shape=jax.ShapeDtypeStruct((MP, NO), f32),
        grid_spec=pltpu.PrefetchScalarGridSpec(
            num_scalar_prefetch=0,
            grid=(n_m, n_k),
            in_specs=in_specs,
            out_specs=out_spec,
            scratch_shapes=scratch,
        ),
        compiler_params=pltpu.CompilerParams(
            dimension_semantics=("parallel", "arbitrary"),
            vmem_limit_bytes=vmem_limit,
        ),
    )(imgs2d, imgs2d, wf, bf, wfc, bfc, w1s, b1p, w2p, b2p)

    return out[:B, :meta.n_out]


def two_images_forward(imgs, prepared, *, tk_max=2048, tm_cap=512, buffers=3):
    """imgs: (B, 2, C, H, W) float; prepared: result of prepare_two_images_params(params)."""
    arrays, meta = prepared
    return _two_images_forward_impl(imgs, arrays, meta, tk_max, tm_cap, buffers,
                                    _vmem_budget_bytes())


# ------------------------------------------------------------------------ test utilities


def _make_params(key, flat_dim, num_ftrs_A, num_ftrs_B, hidden_units):
    ks = jax.random.split(key, 12)

    def lin(k, fan_in, fan_out):
        s = 1.0 / np.sqrt(fan_in)
        return jax.random.uniform(k, (fan_in, fan_out), jnp.float32, -s, s)

    def bias(k, fan_in, fan_out):
        s = 1.0 / np.sqrt(fan_in)
        return jax.random.uniform(k, (1, fan_out), jnp.float32, -s, s)

    wfA = lin(ks[0], flat_dim, num_ftrs_A); bfA = bias(ks[1], flat_dim, num_ftrs_A)
    wA  = lin(ks[2], num_ftrs_A, 256);      bA  = bias(ks[3], num_ftrs_A, 256)
    wfB = lin(ks[4], flat_dim, num_ftrs_B); bfB = bias(ks[5], flat_dim, num_ftrs_B)
    wB  = lin(ks[6], num_ftrs_B, 256);      bB  = bias(ks[7], num_ftrs_B, 256)
    w1  = lin(ks[8], 512, hidden_units);    b1  = bias(ks[9], 512, hidden_units)
    w2  = lin(ks[10], hidden_units, 3);     b2  = bias(ks[11], hidden_units, 3)
    return (wfA, bfA, wA, bA, wfB, bfB, wB, bB, w1, b1, w2, b2)


def _reference_forward(imgs, params):
    """Pure-JAX reference mirroring the kernel's bf16-matmul / f32-accumulate precision."""
    (wfA, bfA, wA, bA, wfB, bfB, wB, bB, w1, b1, w2, b2) = params
    bf16 = jnp.bfloat16

    def mm(x, w):
        return jnp.dot(x.astype(bf16), w.astype(bf16), preferred_element_type=jnp.float32)

    B = imgs.shape[0]
    imgA = imgs[:, 0].reshape(B, -1)
    imgB = imgs[:, 1].reshape(B, -1)
    featA = jnp.maximum(mm(imgA, wfA) + bfA, 0.0)
    featB = jnp.maximum(mm(imgB, wfB) + bfB, 0.0)
    xA = mm(featA, wA) + bA
    xB = mm(featB, wB) + bB
    x = jnp.concatenate([xA, xB], axis=1)
    h = mm(x, w1) + b1
    h = jnp.where(h > 0, h, 0.01 * h)
    return mm(h, w2) + b2


if __name__ == "__main__":
    # small shapes: batch=2, 2 images per sample, channels=4, spatial=16x16
    B, C, H, W = 2, 4, 16, 16
    num_ftrs_A = num_ftrs_B = 32   # stand-in for resnet fc.in_features
    hidden_units = 32
    flat_dim = C * H * W

    key = jax.random.PRNGKey(0)
    k_img, k_par = jax.random.split(key)
    imgs = jax.random.normal(k_img, (B, 2, C, H, W), jnp.float32)
    params = _make_params(k_par, flat_dim, num_ftrs_A, num_ftrs_B, hidden_units)

    prepared = prepare_two_images_params(params)   # one-time weight formatting
    ref = np.asarray(_reference_forward(imgs, params), dtype=np.float32)

    # Default path: flat_dim fits one K tile -> single-K kernel, no accumulator scratch.
    out = jax.block_until_ready(two_images_forward(imgs, prepared))
    assert out.shape == (B, 3)
    np.testing.assert_allclose(np.asarray(out, dtype=np.float32), ref, rtol=2e-2, atol=2e-3)

    # K-streaming path: force several K tiles to exercise the accumulator kernel.
    out2 = jax.block_until_ready(two_images_forward(imgs, prepared, tk_max=256))
    np.testing.assert_allclose(np.asarray(out2, dtype=np.float32), ref, rtol=2e-2, atol=2e-3)

    print("KERNEL_OK")
</pallas_src>

<mosaic_0001>
module attributes {stable_mosaic.version = 11 : i64} {
  func.func @_kernel_single_k(%arg0: i32, %arg1: i32, %arg2: memref<2x1024xf32, #tpu.memory_space<vmem>>, %arg3: memref<2x1024xf32, #tpu.memory_space<vmem>>, %arg4: memref<2x1024x128xbf16, #tpu.memory_space<vmem>>, %arg5: memref<2x1x128xf32, #tpu.memory_space<vmem>>, %arg6: memref<2x128x256xbf16, #tpu.memory_space<vmem>>, %arg7: memref<2x1x256xf32, #tpu.memory_space<vmem>>, %arg8: memref<2x256x128xbf16, #tpu.memory_space<vmem>>, %arg9: memref<1x128xf32, #tpu.memory_space<vmem>>, %arg10: memref<128x128xbf16, #tpu.memory_space<vmem>>, %arg11: memref<1x128xf32, #tpu.memory_space<vmem>>, %arg12: memref<2x128xf32, #tpu.memory_space<vmem>>) attributes {dimension_semantics = [#tpu.dimension_semantics<parallel>, #tpu.dimension_semantics<arbitrary>], iteration_bounds = array<i64: 1, 1>, scalar_prefetch = 0 : i64, scratch_operands = 0 : i64, tpu.core_type = #tpu.core_type<tc>, window_params = [{pipeline_mode = #tpu.pipeline_mode<double_buffered>, transform_indices = @transform_0, window_bounds = array<i64: 2, 1024>}, {pipeline_mode = #tpu.pipeline_mode<double_buffered>, transform_indices = @transform_1, window_bounds = array<i64: 2, 1024>}, {pipeline_mode = #tpu.pipeline_mode<double_buffered>, transform_indices = @transform_2, window_bounds = array<i64: 2, 1024, 128>}, {pipeline_mode = #tpu.pipeline_mode<synchronous>, transform_indices = @transform_3, window_bounds = array<i64: 2, 1, 128>}, {pipeline_mode = #tpu.pipeline_mode<synchronous>, transform_indices = @transform_4, window_bounds = array<i64: 2, 128, 256>}, {pipeline_mode = #tpu.pipeline_mode<synchronous>, transform_indices = @transform_5, window_bounds = array<i64: 2, 1, 256>}, {pipeline_mode = #tpu.pipeline_mode<synchronous>, transform_indices = @transform_6, window_bounds = array<i64: 2, 256, 128>}, {pipeline_mode = #tpu.pipeline_mode<synchronous>, transform_indices = @transform_7, window_bounds = array<i64: 1, 128>}, {pipeline_mode = #tpu.pipeline_mode<synchronous>, transform_indices = @transform_8, window_bounds = array<i64: 128, 128>}, {pipeline_mode = #tpu.pipeline_mode<synchronous>, transform_indices = @transform_9, window_bounds = array<i64: 1, 128>}, {transform_indices = @transform_10, window_bounds = array<i64: 2, 128>}]} {
    %c0 = arith.constant 0 : index
    %c0_0 = arith.constant 0 : index
    %0 = vector.load %arg2[%c0, %c0_0] : memref<2x1024xf32, #tpu.memory_space<vmem>>, vector<2x1024xf32>
    %1 = arith.truncf %0 : vector<2x1024xf32> to vector<2x1024xbf16>
    %c0_1 = arith.constant 0 : index
    %c0_2 = arith.constant 0 : index
    %c0_3 = arith.constant 0 : index
    %2 = vector.load %arg4[%c0_1, %c0_2, %c0_3] : memref<2x1024x128xbf16, #tpu.memory_space<vmem>>, vector<1x1024x128xbf16>
    %3 = vector.shape_cast %2 : vector<1x1024x128xbf16> to vector<1024x128xbf16>
    %cst = arith.constant dense<0.000000e+00> : vector<2x128xf32>
    %4 = tpu.matmul %1, %3, %cst {dimension_numbers = #tpu.dot_dimension_numbers<[1], [0], [0], [1], [0, 0, 1, 1], [], []>} : vector<2x1024xbf16>, vector<1024x128xbf16>, vector<2x128xf32> -> vector<2x128xf32>
    %c0_4 = arith.constant 0 : index
    %c0_5 = arith.constant 0 : index
    %5 = vector.load %arg3[%c0_4, %c0_5] : memref<2x1024xf32, #tpu.memory_space<vmem>>, vector<2x1024xf32>
    %6 = arith.truncf %5 : vector<2x1024xf32> to vector<2x1024xbf16>
    %c1 = arith.constant 1 : index
    %c0_6 = arith.constant 0 : index
    %c0_7 = arith.constant 0 : index
    %7 = vector.load %arg4[%c1, %c0_6, %c0_7] : memref<2x1024x128xbf16, #tpu.memory_space<vmem>>, vector<1x1024x128xbf16>
    %8 = vector.shape_cast %7 : vector<1x1024x128xbf16> to vector<1024x128xbf16>
    %cst_8 = arith.constant dense<0.000000e+00> : vector<2x128xf32>
    %9 = tpu.matmul %6, %8, %cst_8 {dimension_numbers = #tpu.dot_dimension_numbers<[1], [0], [0], [1], [0, 0, 1, 1], [], []>} : vector<2x1024xbf16>, vector<1024x128xbf16>, vector<2x128xf32> -> vector<2x128xf32>
    %c0_9 = arith.constant 0 : index
    %c0_10 = arith.constant 0 : index
    %c0_11 = arith.constant 0 : index
    %10 = vector.load %arg5[%c0_9, %c0_10, %c0_11] : memref<2x1x128xf32, #tpu.memory_space<vmem>>, vector<1x1x128xf32>
    %11 = vector.shape_cast %10 : vector<1x1x128xf32> to vector<1x128xf32>
    %12 = vector.broadcast %11 : vector<1x128xf32> to vector<2x128xf32>
    %13 = arith.addf %4, %12 : vector<2x128xf32>
    %cst_12 = arith.constant 0.000000e+00 : f32
    %14 = vector.broadcast %cst_12 : f32 to vector<2x128xf32>
    %15 = arith.maximumf %13, %14 : vector<2x128xf32>
    %16 = arith.truncf %15 : vector<2x128xf32> to vector<2x128xbf16>
    %c1_13 = arith.constant 1 : index
    %c0_14 = arith.constant 0 : index
    %c0_15 = arith.constant 0 : index
    %17 = vector.load %arg5[%c1_13, %c0_14, %c0_15] : memref<2x1x128xf32, #tpu.memory_space<vmem>>, vector<1x1x128xf32>
    %18 = vector.shape_cast %17 : vector<1x1x128xf32> to vector<1x128xf32>
    %19 = vector.broadcast %18 : vector<1x128xf32> to vector<2x128xf32>
    %20 = arith.addf %9, %19 : vector<2x128xf32>
    %cst_16 = arith.constant 0.000000e+00 : f32
    %21 = vector.broadcast %cst_16 : f32 to vector<2x128xf32>
    %22 = arith.maximumf %20, %21 : vector<2x128xf32>
    %23 = arith.truncf %22 : vector<2x128xf32> to vector<2x128xbf16>
    %c0_17 = arith.constant 0 : index
    %c0_18 = arith.constant 0 : index
    %c0_19 = arith.constant 0 : index
    %24 = vector.load %arg6[%c0_17, %c0_18, %c0_19] : memref<2x128x256xbf16, #tpu.memory_space<vmem>>, vector<1x128x256xbf16>
    %25 = vector.shape_cast %24 : vector<1x128x256xbf16> to vector<128x256xbf16>
    %cst_20 = arith.constant dense<0.000000e+00> : vector<2x256xf32>
    %26 = tpu.matmul %16, %25, %cst_20 {dimension_numbers = #tpu.dot_dimension_numbers<[1], [0], [0], [1], [0, 0, 1, 1], [], []>} : vector<2x128xbf16>, vector<128x256xbf16>, vector<2x256xf32> -> vector<2x256xf32>
    %c0_21 = arith.constant 0 : index
    %c0_22 = arith.constant 0 : index
    %c0_23 = arith.constant 0 : index
    %27 = vector.load %arg7[%c0_21, %c0_22, %c0_23] : memref<2x1x256xf32, #tpu.memory_space<vmem>>, vector<1x1x256xf32>
    %28 = vector.shape_cast %27 : vector<1x1x256xf32> to vector<1x256xf32>
    %29 = vector.broadcast %28 : vector<1x256xf32> to vector<2x256xf32>
    %30 = arith.addf %26, %29 : vector<2x256xf32>
    %c1_24 = arith.constant 1 : index
    %c0_25 = arith.constant 0 : index
    %c0_26 = arith.constant 0 : index
    %31 = vector.load %arg6[%c1_24, %c0_25, %c0_26] : memref<2x128x256xbf16, #tpu.memory_space<vmem>>, vector<1x128x256xbf16>
    %32 = vector.shape_cast %31 : vector<1x128x256xbf16> to vector<128x256xbf16>
    %cst_27 = arith.constant dense<0.000000e+00> : vector<2x256xf32>
    %33 = tpu.matmul %23, %32, %cst_27 {dimension_numbers = #tpu.dot_dimension_numbers<[1], [0], [0], [1], [0, 0, 1, 1], [], []>} : vector<2x128xbf16>, vector<128x256xbf16>, vector<2x256xf32> -> vector<2x256xf32>
    %c1_28 = arith.constant 1 : index
    %c0_29 = arith.constant 0 : index
    %c0_30 = arith.constant 0 : index
    %34 = vector.load %arg7[%c1_28, %c0_29, %c0_30] : memref<2x1x256xf32, #tpu.memory_space<vmem>>, vector<1x1x256xf32>
    %35 = vector.shape_cast %34 : vector<1x1x256xf32> to vector<1x256xf32>
    %36 = vector.broadcast %35 : vector<1x256xf32> to vector<2x256xf32>
    %37 = arith.addf %33, %36 : vector<2x256xf32>
    %38 = arith.truncf %30 : vector<2x256xf32> to vector<2x256xbf16>
    %c0_31 = arith.constant 0 : index
    %c0_32 = arith.constant 0 : index
    %c0_33 = arith.constant 0 : index
    %39 = vector.load %arg8[%c0_31, %c0_32, %c0_33] : memref<2x256x128xbf16, #tpu.memory_space<vmem>>, vector<1x256x128xbf16>
    %40 = vector.shape_cast %39 : vector<1x256x128xbf16> to vector<256x128xbf16>
    %cst_34 = arith.constant dense<0.000000e+00> : vector<2x128xf32>
    %41 = tpu.matmul %38, %40, %cst_34 {dimension_numbers = #tpu.dot_dimension_numbers<[1], [0], [0], [1], [0, 0, 1, 1], [], []>} : vector<2x256xbf16>, vector<256x128xbf16>, vector<2x128xf32> -> vector<2x128xf32>
    %42 = arith.truncf %37 : vector<2x256xf32> to vector<2x256xbf16>
    %c1_35 = arith.constant 1 : index
    %c0_36 = arith.constant 0 : index
    %c0_37 = arith.constant 0 : index
    %43 = vector.load %arg8[%c1_35, %c0_36, %c0_37] : memref<2x256x128xbf16, #tpu.memory_space<vmem>>, vector<1x256x128xbf16>
    %44 = vector.shape_cast %43 : vector<1x256x128xbf16> to vector<256x128xbf16>
    %cst_38 = arith.constant dense<0.000000e+00> : vector<2x128xf32>
    %45 = tpu.matmul %42, %44, %cst_38 {dimension_numbers = #tpu.dot_dimension_numbers<[1], [0], [0], [1], [0, 0, 1, 1], [], []>} : vector<2x256xbf16>, vector<256x128xbf16>, vector<2x128xf32> -> vector<2x128xf32>
    %46 = arith.addf %41, %45 : vector<2x128xf32>
    %c0_39 = arith.constant 0 : index
    %c0_40 = arith.constant 0 : index
    %47 = vector.load %arg9[%c0_39, %c0_40] : memref<1x128xf32, #tpu.memory_space<vmem>>, vector<1x128xf32>
    %48 = vector.broadcast %47 : vector<1x128xf32> to vector<2x128xf32>
    %49 = arith.addf %46, %48 : vector<2x128xf32>
    %cst_41 = arith.constant 0.000000e+00 : f32
    %50 = vector.broadcast %cst_41 : f32 to vector<2x128xf32>
    %51 = arith.cmpf ogt, %49, %50 : vector<2x128xf32>
    %cst_42 = arith.constant 0.00999999977 : f32
    %52 = vector.broadcast %cst_42 : f32 to vector<2x128xf32>
    %53 = arith.mulf %52, %49 : vector<2x128xf32>
    %54 = arith.select %51, %49, %53 : vector<2x128xi1>, vector<2x128xf32>
    %55 = arith.truncf %54 : vector<2x128xf32> to vector<2x128xbf16>
    %c0_43 = arith.constant 0 : index
    %c0_44 = arith.constant 0 : index
    %56 = vector.load %arg10[%c0_43, %c0_44] : memref<128x128xbf16, #tpu.memory_space<vmem>>, vector<128x128xbf16>
    %cst_45 = arith.constant dense<0.000000e+00> : vector<2x128xf32>
    %57 = tpu.matmul %55, %56, %cst_45 {dimension_numbers = #tpu.dot_dimension_numbers<[1], [0], [0], [1], [0, 0, 1, 1], [], []>} : vector<2x128xbf16>, vector<128x128xbf16>, vector<2x128xf32> -> vector<2x128xf32>
    %c0_46 = arith.constant 0 : index
    %c0_47 = arith.constant 0 : index
    %58 = vector.load %arg11[%c0_46, %c0_47] : memref<1x128xf32, #tpu.memory_space<vmem>>, vector<1x128xf32>
    %59 = vector.broadcast %58 : vector<1x128xf32> to vector<2x128xf32>
    %60 = arith.addf %57, %59 : vector<2x128xf32>
    %c0_48 = arith.constant 0 : index
    %c0_49 = arith.constant 0 : index
    %61 = vector.load %arg12[%c0_48, %c0_49] : memref<2x128xf32, #tpu.memory_space<vmem>>, vector<2x128xf32>
    tpu.vector_store %arg12[%c0_48, %c0_49], %60 {strides = array<i32>} : memref<2x128xf32, #tpu.memory_space<vmem>>, vector<2x128xf32>,
    return
  }
  func.func @transform_0(%arg0: i32, %arg1: i32) -> (i32, i32) {
    %c0_i32 = arith.constant 0 : i32
    return %arg0, %arg1 : i32, i32
  }
  func.func @transform_1(%arg0: i32, %arg1: i32) -> (i32, i32) {
    %c1_i32 = arith.constant 1 : i32
    %0 = arith.addi %c1_i32, %arg1 : i32
    %c0_i32 = arith.constant 0 : i32
    return %arg0, %0 : i32, i32
  }
  func.func @transform_2(%arg0: i32, %arg1: i32) -> (i32, i32, i32) {
    %c0_i32 = arith.constant 0 : i32
    %c0_i32_0 = arith.constant 0 : i32
    %c0_i32_1 = arith.constant 0 : i32
    return %c0_i32, %arg1, %c0_i32_0 : i32, i32, i32
  }
  func.func @transform_3(%arg0: i32, %arg1: i32) -> (i32, i32, i32) {
    %c0_i32 = arith.constant 0 : i32
    %c0_i32_0 = arith.constant 0 : i32
    %c0_i32_1 = arith.constant 0 : i32
    %c0_i32_2 = arith.constant 0 : i32
    return %c0_i32, %c0_i32_0, %c0_i32_1 : i32, i32, i32
  }
  func.func @transform_4(%arg0: i32, %arg1: i32) -> (i32, i32, i32) {
    %c0_i32 = arith.constant 0 : i32
    %c0_i32_0 = arith.constant 0 : i32
    %c0_i32_1 = arith.constant 0 : i32
    %c0_i32_2 = arith.constant 0 : i32
    return %c0_i32, %c0_i32_0, %c0_i32_1 : i32, i32, i32
  }
  func.func @transform_5(%arg0: i32, %arg1: i32) -> (i32, i32, i32) {
    %c0_i32 = arith.constant 0 : i32
    %c0_i32_0 = arith.constant 0 : i32
    %c0_i32_1 = arith.constant 0 : i32
    %c0_i32_2 = arith.constant 0 : i32
    return %c0_i32, %c0_i32_0, %c0_i32_1 : i32, i32, i32
  }
  func.func @transform_6(%arg0: i32, %arg1: i32) -> (i32, i32, i32) {
    %c0_i32 = arith.constant 0 : i32
    %c0_i32_0 = arith.constant 0 : i32
    %c0_i32_1 = arith.constant 0 : i32
    %c0_i32_2 = arith.constant 0 : i32
    return %c0_i32, %c0_i32_0, %c0_i32_1 : i32, i32, i32
  }
  func.func @transform_7(%arg0: i32, %arg1: i32) -> (i32, i32) {
    %c0_i32 = arith.constant 0 : i32
    %c0_i32_0 = arith.constant 0 : i32
    %c0_i32_1 = arith.constant 0 : i32
    return %c0_i32, %c0_i32_0 : i32, i32
  }
  func.func @transform_8(%arg0: i32, %arg1: i32) -> (i32, i32) {
    %c0_i32 = arith.constant 0 : i32
    %c0_i32_0 = arith.constant 0 : i32
    %c0_i32_1 = arith.constant 0 : i32
    return %c0_i32, %c0_i32_0 : i32, i32
  }
  func.func @transform_9(%arg0: i32, %arg1: i32) -> (i32, i32) {
    %c0_i32 = arith.constant 0 : i32
    %c0_i32_0 = arith.constant 0 : i32
    %c0_i32_1 = arith.constant 0 : i32
    return %c0_i32, %c0_i32_0 : i32, i32
  }
  func.func @transform_10(%arg0: i32, %arg1: i32) -> (i32, i32) {
    %c0_i32 = arith.constant 0 : i32
    %c0_i32_0 = arith.constant 0 : i32
    return %arg0, %c0_i32 : i32, i32
  }
}

</mosaic_0001>

<llo_original>
// kernel: _two_images_forward_impl.1
$region0: #{_two_images_forward_impl.1}
  #allocation0 [shape = 'u32[]', space=smem, size = 0x4, offset = 0x4, fixed_abs, tag = 'smem constant byte address 0x4 - core index']
  #allocation1 [shape = 'u32[144,128]{1,0:T(1,128)}', space=vmem, size = 0x12000, scoped, tag = 'internal scratch']
  %s0 = inlined_call_operand.vmem [shape: f32[2,2048], index: 0, kind: input, shape index: {}, may-alias: {0,1}]
  %s1 = inlined_call_operand.vmem [shape: f32[2,2048], index: 1, kind: input, shape index: {}, may-alias: {0,1}]
  %s2 = inlined_call_operand.hbm [shape: bf16[2,1024,128], index: 2, kind: input, shape index: {}]
  %s3 = inlined_call_operand.vmem [shape: f32[2,1,128], index: 3, kind: input, shape index: {}]
  %s4 = inlined_call_operand.vmem [shape: bf16[2,128,256], index: 4, kind: input, shape index: {}]
  %s5 = inlined_call_operand.vmem [shape: f32[2,1,256], index: 5, kind: input, shape index: {}]
  %s6 = inlined_call_operand.hbm [shape: bf16[2,256,128], index: 6, kind: input, shape index: {}]
  %s7 = inlined_call_operand.vmem [shape: f32[1,128], index: 7, kind: input, shape index: {}]
  %s8 = inlined_call_operand.hbm [shape: bf16[128,128], index: 8, kind: input, shape index: {}]
  %s9 = inlined_call_operand.vmem [shape: f32[1,128], index: 9, kind: input, shape index: {}]
  %s10 = inlined_call_operand.hbm [shape: f32[2,128], index: 10, kind: output, shape index: {}]
  %s11 = sld [smem:[#allocation0]]
  $region62: #{_two_images_forward_impl.1} parent=0
    _
  %s13 = ssub.s32 1, %s11
  %s14 = scalar_select 0, %s13, %s11
  $region1: #{_two_images_forward_impl.1} parent=0
    #allocation2 [shape = 'u8[524288]{0}', space=vmem, size = 0x80000, scoped, tag = 'input window, operand 2, single buffered']
    #allocation3 [shape = 's32[1]{0}', space=sflag, size = 0x4, scoped, tag = 'scoped memory for _two_images_forward_impl.1']
    #allocation4 [shape = 's32[1]{0}', space=sflag, size = 0x4, scoped, tag = 'scoped memory for _two_images_forward_impl.1']
    #allocation5 [shape = 'u8[131072]{0}', space=vmem, size = 0x20000, scoped, tag = 'input window, operand 6, single buffered']
    #allocation6 [shape = 's32[1]{0}', space=sflag, size = 0x4, scoped, tag = 'scoped memory for _two_images_forward_impl.1']
    #allocation7 [shape = 'u8[32768]{0}', space=vmem, size = 0x8000, scoped, tag = 'input window, operand 8, single buffered']
    #allocation8 [shape = 'u8[1024]{0}', space=vmem, size = 0x400, scoped, tag = 'output window, operand 0, single buffered']
    %15 = vsyncpa [#allocation3], 0
    %16 = vsyncpa [#allocation6], 0
    %17 = vsyncpa [#allocation4], 0
    // Predicated region
    $region2: #{_two_images_forward_impl.1} parent=1 // pred_check
      _
    $region3: #{_two_images_forward_impl.1} parent=1 // pred_check_branch
      %19 = sbr.rel (0) target = $region5
    $region4: #{_two_images_forward_impl.1} parent=1 // pred_region
      _
    $region5: #{_two_images_forward_impl.1} parent=1 // pred_fallthru
      _
    // Predicated region
    $region6: #{_two_images_forward_impl.1} parent=1 // pred_check
      _
    $region7: #{_two_images_forward_impl.1} parent=1 // pred_check_branch
      %21 = sbr.rel (0) target = $region9
    $region8: #{_two_images_forward_impl.1} parent=1 // pred_region
      %s22 = sadd.s32 0, 1
      %s23 = smul.u32 8, %s22
      %p24 = scmp.lt.s32.totalorder %s23, 15
      %s25 = scalar_select %p24, %s23, 15
      %s26 = smul.addr %s25, 2
      %s27 = scalar_lea.vmem %s1, %s26
      %s28 = sadd.s32 0, 1
      %s29 = smul.u32 8, %s28
    $region9: #{_two_images_forward_impl.1} parent=1 // pred_fallthru
      _
    // Predicated region
    $region10: #{_two_images_forward_impl.1} parent=1 // pred_check
      _
    $region11: #{_two_images_forward_impl.1} parent=1 // pred_check_branch
      %31 = sbr.rel (0) target = $region13
    $region12: #{_two_images_forward_impl.1} parent=1 // pred_region
      %s33 = ssub.s32 16384, 16384
      %34 = vsyncadd [#allocation3], %s33
      %s35 = sshll.u32 [#allocation2], 4
      %s36 = int_to_ptr.vmem [resolvable:$true] %s35
      %41 = dma.hbm_to_vmem [thread:$0]  %s2, 16384, %s36, [#allocation3], 64, 64, 4
    $region13: #{_two_images_forward_impl.1} parent=1 // pred_fallthru
      _
    // Predicated region
    $region14: #{_two_images_forward_impl.1} parent=1 // pred_check
      _
    $region15: #{_two_images_forward_impl.1} parent=1 // pred_check_branch
      %43 = sbr.rel (0) target = $region17
    $region16: #{_two_images_forward_impl.1} parent=1 // pred_region
      _
    $region17: #{_two_images_forward_impl.1} parent=1 // pred_fallthru
      _
    // Predicated region
    $region18: #{_two_images_forward_impl.1} parent=1 // pred_check
      _
    $region19: #{_two_images_forward_impl.1} parent=1 // pred_check_branch
      %45 = sbr.rel (0) target = $region21
    $region20: #{_two_images_forward_impl.1} parent=1 // pred_region
      _
    $region21: #{_two_images_forward_impl.1} parent=1 // pred_fallthru
      _
    // Predicated region
    $region22: #{_two_images_forward_impl.1} parent=1 // pred_check
      _
    $region23: #{_two_images_forward_impl.1} parent=1 // pred_check_branch
      %47 = sbr.rel (0) target = $region25
    $region24: #{_two_images_forward_impl.1} parent=1 // pred_region
      _
    $region25: #{_two_images_forward_impl.1} parent=1 // pred_fallthru
      _
    // Predicated region
    $region26: #{_two_images_forward_impl.1} parent=1 // pred_check
      _
    $region27: #{_two_images_forward_impl.1} parent=1 // pred_check_branch
      %49 = sbr.rel (0) target = $region29
    $region28: #{_two_images_forward_impl.1} parent=1 // pred_region
      %s51 = ssub.s32 4096, 4096
      %52 = vsyncadd [#allocation6], %s51
      %s53 = sshll.u32 [#allocation5], 4
      %s54 = int_to_ptr.vmem [resolvable:$true] %s53
      %59 = dma.hbm_to_vmem [thread:$0]  %s6, 4096, %s54, [#allocation6], 64, 64, 4
    $region29: #{_two_images_forward_impl.1} parent=1 // pred_fallthru
      _
    // Predicated region
    $region30: #{_two_images_forward_impl.1} parent=1 // pred_check
      _
    $region31: #{_two_images_forward_impl.1} parent=1 // pred_check_branch
      %61 = sbr.rel (0) target = $region33
    $region32: #{_two_images_forward_impl.1} parent=1 // pred_region
      _
    $region33: #{_two_images_forward_impl.1} parent=1 // pred_fallthru
      _
    // Predicated region
    $region34: #{_two_images_forward_impl.1} parent=1 // pred_check
      _
    $region35: #{_two_images_forward_impl.1} parent=1 // pred_check_branch
      %63 = sbr.rel (0) target = $region37
    $region36: #{_two_images_forward_impl.1} parent=1 // pred_region
      %s65 = ssub.s32 1024, 1024
      %66 = vsyncadd [#allocation6], %s65
      %s67 = sshll.u32 [#allocation7], 4
      %s68 = int_to_ptr.vmem [resolvable:$true] %s67
      %73 = dma.hbm_to_vmem [thread:$0]  %s8, 1024, %s68, [#allocation6], 64, 64, 4
    $region37: #{_two_images_forward_impl.1} parent=1 // pred_fallthru
      _
    // Predicated region
    $region38: #{_two_images_forward_impl.1} parent=1 // pred_check
      _
    $region39: #{_two_images_forward_impl.1} parent=1 // pred_check_branch
      %75 = sbr.rel (0) target = $region41
    $region40: #{_two_images_forward_impl.1} parent=1 // pred_region
      _
    $region41: #{_two_images_forward_impl.1} parent=1 // pred_fallthru
      _
    // Predicated region
    $region42: #{_two_images_forward_impl.1} parent=1 // pred_check
      _
    $region43: #{_two_images_forward_impl.1} parent=1 // pred_check_branch
      %77 = sbr.rel (0) target = $region45
    $region44: #{_two_images_forward_impl.1} parent=1 // pred_region
      %78 = dma.done [#allocation3], 16384
    $region45: #{_two_images_forward_impl.1} parent=1 // pred_fallthru
      _
    // Predicated region
    $region46: #{_two_images_forward_impl.1} parent=1 // pred_check
      _
    $region47: #{_two_images_forward_impl.1} parent=1 // pred_check_branch
      %80 = sbr.rel (0) target = $region49
    $region48: #{_two_images_forward_impl.1} parent=1 // pred_region
      %81 = dma.done [#allocation6], 4096
    $region49: #{_two_images_forward_impl.1} parent=1 // pred_fallthru
      _
    // Predicated region
    $region50: #{_two_images_forward_impl.1} parent=1 // pred_check
      _
    $region51: #{_two_images_forward_impl.1} parent=1 // pred_check_branch
      %83 = sbr.rel (0) target = $region53
    $region52: #{_two_images_forward_impl.1} parent=1 // pred_region
      %84 = dma.done [#allocation6], 1024
    $region53: #{_two_images_forward_impl.1} parent=1 // pred_fallthru
      _
    %s85 = sadd.s32 0, 1
    %s86 = smul.u32 8, %s85
    %p87 = scmp.lt.s32.totalorder %s86, 15
    %s88 = scalar_select %p87, %s86, 15
    %s89 = smul.addr %s88, 2
    %s90 = scalar_lea.vmem %s1, %s89
    %s91 = sadd.s32 0, 1
    %s92 = smul.u32 8, %s91
    %p93 = scmp.lt.s32.totalorder %s92, 15
    %s94 = scalar_select %p93, %s92, 15
    %s95 = smul.addr %s94, 2
    %s96 = scalar_lea.vmem %s1, %s95
    %s97 = sadd.s32 0, 1
    %s98 = smul.u32 8, %s97
    %v100 = vld [vmem:[%s0] sm:$0xff]
    %v101 = vld [vmem:[%s0 + $0x8] sm:$0xff]
    %v104 = vcombine.high %v100, %v100
    %v106 = vunpack.c.l.s4 1983009808
    %v107 = vunpack.c.0.s8 %v106
    %v108 = vlaneseq
    %v109 = vshrl.u32 %v108, 7
    %v110 = vsub.s32 %v107, %v109
    %v111 = vrot.slane %v100, %v110
    %v113 = vunpack.c.l.s4 1983009808
    %v114 = vunpack.c.0.s8 %v113
    %v115 = vlaneseq
    %v116 = vshrl.u32 %v115, 7
    %v117 = vsub.s32 %v114, %v116
    %v118 = vrot.slane %v104, %v117
    %v119 = vcombine.high %v111, %v111
    %v120 = vcombine.high %v118, %v118
    %v121 = vcombine.high %v101, %v101
    %v123 = vunpack.c.l.s4 1983009808
    %v124 = vunpack.c.0.s8 %v123
    %v125 = vlaneseq
    %v126 = vshrl.u32 %v125, 7
    %v127 = vsub.s32 %v124, %v126
    %v128 = vrot.slane %v101, %v127
    %v130 = vunpack.c.l.s4 1983009808
    %v131 = vunpack.c.0.s8 %v130
    %v132 = vlaneseq
    %v133 = vshrl.u32 %v132, 7
    %v134 = vsub.s32 %v131, %v133
    %v135 = vrot.slane %v121, %v134
    %v136 = vcombine.high %v128, %v128
    %v137 = vcombine.high %v135, %v135
    %v146 = vpack.c.bf16 %v111, %v111
    %v147 = vpack.c.bf16 %v119, %v119
    %v148 = vpack.c.bf16 %v118, %v118
    %v149 = vpack.c.bf16 %v120, %v120
    %v150 = vpack.c.bf16 %v128, %v128
    %v151 = vpack.c.bf16 %v136, %v136
    %v152 = vpack.c.bf16 %v135, %v135
    %v153 = vpack.c.bf16 %v137, %v137
    %v154 = vld [vmem:[#allocation2] sm:$0xf]
    %v155 = vld [vmem:[#allocation2 + $0x4] sm:$0xf]
    %v156 = vld [vmem:[#allocation2 + $0x8] sm:$0xf]
    %v157 = vld [vmem:[#allocation2 + $0xc] sm:$0xf]
    %v158 = vld [vmem:[#allocation2 + $0x10] sm:$0xf]
    %v159 = vld [vmem:[#allocation2 + $0x14] sm:$0xf]
    %v160 = vld [vmem:[#allocation2 + $0x18] sm:$0xf]
    %v161 = vld [vmem:[#allocation2 + $0x1c] sm:$0xf]
    %v162 = vld [vmem:[#allocation2 + $0x20] sm:$0xf]
    %v163 = vld [vmem:[#allocation2 + $0x24] sm:$0xf]
    %v164 = vld [vmem:[#allocation2 + $0x28] sm:$0xf]
    %v165 = vld [vmem:[#allocation2 + $0x2c] sm:$0xf]
    %v166 = vld [vmem:[#allocation2 + $0x30] sm:$0xf]
    %v167 = vld [vmem:[#allocation2 + $0x34] sm:$0xf]
    %v168 = vld [vmem:[#allocation2 + $0x38] sm:$0xf]
    %v169 = vld [vmem:[#allocation2 + $0x3c] sm:$0xf]
    %v170 = vld [vmem:[#allocation2 + $0x40] sm:$0xf]
    %v171 = vld [vmem:[#allocation2 + $0x44] sm:$0xf]
    %v172 = vld [vmem:[#allocation2 + $0x48] sm:$0xf]
    %v173 = vld [vmem:[#allocation2 + $0x4c] sm:$0xf]
    %v174 = vld [vmem:[#allocation2 + $0x50] sm:$0xf]
    %v175 = vld [vmem:[#allocation2 + $0x54] sm:$0xf]
    %v176 = vld [vmem:[#allocation2 + $0x58] sm:$0xf]
    %v177 = vld [vmem:[#allocation2 + $0x5c] sm:$0xf]
    %v178 = vld [vmem:[#allocation2 + $0x60] sm:$0xf]
    %v179 = vld [vmem:[#allocation2 + $0x64] sm:$0xf]
    %v180 = vld [vmem:[#allocation2 + $0x68] sm:$0xf]
    %v181 = vld [vmem:[#allocation2 + $0x6c] sm:$0xf]
    %v182 = vld [vmem:[#allocation2 + $0x70] sm:$0xf]
    %v183 = vld [vmem:[#allocation2 + $0x74] sm:$0xf]
    %v184 = vld [vmem:[#allocation2 + $0x78] sm:$0xf]
    %v185 = vld [vmem:[#allocation2 + $0x7c] sm:$0xf]
    %v186 = vld [vmem:[#allocation2 + $0x80] sm:$0xf]
    %v187 = vld [vmem:[#allocation2 + $0x84] sm:$0xf]
    %v188 = vld [vmem:[#allocation2 + $0x88] sm:$0xf]
    %v189 = vld [vmem:[#allocation2 + $0x8c] sm:$0xf]
    %v190 = vld [vmem:[#allocation2 + $0x90] sm:$0xf]
    %v191 = vld [vmem:[#allocation2 + $0x94] sm:$0xf]
    %v192 = vld [vmem:[#allocation2 + $0x98] sm:$0xf]
    %v193 = vld [vmem:[#allocation2 + $0x9c] sm:$0xf]
    %v194 = vld [vmem:[#allocation2 + $0xa0] sm:$0xf]
    %v195 = vld [vmem:[#allocation2 + $0xa4] sm:$0xf]
    %v196 = vld [vmem:[#allocation2 + $0xa8] sm:$0xf]
    %v197 = vld [vmem:[#allocation2 + $0xac] sm:$0xf]
    %v198 = vld [vmem:[#allocation2 + $0xb0] sm:$0xf]
    %v199 = vld [vmem:[#allocation2 + $0xb4] sm:$0xf]
    %v200 = vld [vmem:[#allocation2 + $0xb8] sm:$0xf]
    %v201 = vld [vmem:[#allocation2 + $0xbc] sm:$0xf]
    %v202 = vld [vmem:[#allocation2 + $0xc0] sm:$0xf]
    %v203 = vld [vmem:[#allocation2 + $0xc4] sm:$0xf]
    %v204 = vld [vmem:[#allocation2 + $0xc8] sm:$0xf]
    %v205 = vld [vmem:[#allocation2 + $0xcc] sm:$0xf]
    %v206 = vld [vmem:[#allocation2 + $0xd0] sm:$0xf]
    %v207 = vld [vmem:[#allocation2 + $0xd4] sm:$0xf]
    %v208 = vld [vmem:[#allocation2 + $0xd8] sm:$0xf]
    %v209 = vld [vmem:[#allocation2 + $0xdc] sm:$0xf]
    %v210 = vld [vmem:[#allocation2 + $0xe0] sm:$0xf]
    %v211 = vld [vmem:[#allocation2 + $0xe4] sm:$0xf]
    %v212 = vld [vmem:[#allocation2 + $0xe8] sm:$0xf]
    %v213 = vld [vmem:[#allocation2 + $0xec] sm:$0xf]
    %v214 = vld [vmem:[#allocation2 + $0xf0] sm:$0xf]
    %v215 = vld [vmem:[#allocation2 + $0xf4] sm:$0xf]
    %v216 = vld [vmem:[#allocation2 + $0xf8] sm:$0xf]
    %v217 = vld [vmem:[#allocation2 + $0xfc] sm:$0xf]
    %v218 = vld [vmem:[#allocation2 + $0x100] sm:$0xf]
    %v219 = vld [vmem:[#allocation2 + $0x104] sm:$0xf]
    %v220 = vld [vmem:[#allocation2 + $0x108] sm:$0xf]
    %v221 = vld [vmem:[#allocation2 + $0x10c] sm:$0xf]
    %v222 = vld [vmem:[#allocation2 + $0x110] sm:$0xf]
    %v223 = vld [vmem:[#allocation2 + $0x114] sm:$0xf]
    %v224 = vld [vmem:[#allocation2 + $0x118] sm:$0xf]
    %v225 = vld [vmem:[#allocation2 + $0x11c] sm:$0xf]
    %v226 = vld [vmem:[#allocation2 + $0x120] sm:$0xf]
    %v227 = vld [vmem:[#allocation2 + $0x124] sm:$0xf]
    %v228 = vld [vmem:[#allocation2 + $0x128] sm:$0xf]
    %v229 = vld [vmem:[#allocation2 + $0x12c] sm:$0xf]
    %v230 = vld [vmem:[#allocation2 + $0x130] sm:$0xf]
    %v231 = vld [vmem:[#allocation2 + $0x134] sm:$0xf]
    %v232 = vld [vmem:[#allocation2 + $0x138] sm:$0xf]
    %v233 = vld [vmem:[#allocation2 + $0x13c] sm:$0xf]
    %v234 = vld [vmem:[#allocation2 + $0x140] sm:$0xf]
    %v235 = vld [vmem:[#allocation2 + $0x144] sm:$0xf]
    %v236 = vld [vmem:[#allocation2 + $0x148] sm:$0xf]
    %v237 = vld [vmem:[#allocation2 + $0x14c] sm:$0xf]
    %v238 = vld [vmem:[#allocation2 + $0x150] sm:$0xf]
    %v239 = vld [vmem:[#allocation2 + $0x154] sm:$0xf]
    %v240 = vld [vmem:[#allocation2 + $0x158] sm:$0xf]
    %v241 = vld [vmem:[#allocation2 + $0x15c] sm:$0xf]
    %v242 = vld [vmem:[#allocation2 + $0x160] sm:$0xf]
    %v243 = vld [vmem:[#allocation2 + $0x164] sm:$0xf]
    %v244 = vld [vmem:[#allocation2 + $0x168] sm:$0xf]
    %v245 = vld [vmem:[#allocation2 + $0x16c] sm:$0xf]
    %v246 = vld [vmem:[#allocation2 + $0x170] sm:$0xf]
    %v247 = vld [vmem:[#allocation2 + $0x174] sm:$0xf]
    %v248 = vld [vmem:[#allocation2 + $0x178] sm:$0xf]
    %v249 = vld [vmem:[#allocation2 + $0x17c] sm:$0xf]
    %v250 = vld [vmem:[#allocation2 + $0x180] sm:$0xf]
    %v251 = vld [vmem:[#allocation2 + $0x184] sm:$0xf]
    %v252 = vld [vmem:[#allocation2 + $0x188] sm:$0xf]
    %v253 = vld [vmem:[#allocation2 + $0x18c] sm:$0xf]
    %v254 = vld [vmem:[#allocation2 + $0x190] sm:$0xf]
    %v255 = vld [vmem:[#allocation2 + $0x194] sm:$0xf]
    %v256 = vld [vmem:[#allocation2 + $0x198] sm:$0xf]
    %v257 = vld [vmem:[#allocation2 + $0x19c] sm:$0xf]
    %v258 = vld [vmem:[#allocation2 + $0x1a0] sm:$0xf]
    %v259 = vld [vmem:[#allocation2 + $0x1a4] sm:$0xf]
    %v260 = vld [vmem:[#allocation2 + $0x1a8] sm:$0xf]
    %v261 = vld [vmem:[#allocation2 + $0x1ac] sm:$0xf]
    %v262 = vld [vmem:[#allocation2 + $0x1b0] sm:$0xf]
    %v263 = vld [vmem:[#allocation2 + $0x1b4] sm:$0xf]
    %v264 = vld [vmem:[#allocation2 + $0x1b8] sm:$0xf]
    %v265 = vld [vmem:[#allocation2 + $0x1bc] sm:$0xf]
    %v266 = vld [vmem:[#allocation2 + $0x1c0] sm:$0xf]
    %v267 = vld [vmem:[#allocation2 + $0x1c4] sm:$0xf]
    %v268 = vld [vmem:[#allocation2 + $0x1c8] sm:$0xf]
    %v269 = vld [vmem:[#allocation2 + $0x1cc] sm:$0xf]
    %v270 = vld [vmem:[#allocation2 + $0x1d0] sm:$0xf]
    %v271 = vld [vmem:[#allocation2 + $0x1d4] sm:$0xf]
    %v272 = vld [vmem:[#allocation2 + $0x1d8] sm:$0xf]
    %v273 = vld [vmem:[#allocation2 + $0x1dc] sm:$0xf]
    %v274 = vld [vmem:[#allocation2 + $0x1e0] sm:$0xf]
    %v275 = vld [vmem:[#allocation2 + $0x1e4] sm:$0xf]
    %v276 = vld [vmem:[#allocation2 + $0x1e8] sm:$0xf]
    %v277 = vld [vmem:[#allocation2 + $0x1ec] sm:$0xf]
    %v278 = vld [vmem:[#allocation2 + $0x1f0] sm:$0xf]
    %v279 = vld [vmem:[#allocation2 + $0x1f4] sm:$0xf]
    %v280 = vld [vmem:[#allocation2 + $0x1f8] sm:$0xf]
    %v281 = vld [vmem:[#allocation2 + $0x1fc] sm:$0xf]
    %v282 = vld [vmem:[%s96] sm:$0xff]
    %v283 = vld [vmem:[%s96 + $0x8] sm:$0xff]
    %v286 = vcombine.high %v282, %v282
    %v288 = vunpack.c.l.s4 1983009808
    %v289 = vunpack.c.0.s8 %v288
    %v290 = vlaneseq
    %v291 = vshrl.u32 %v290, 7
    %v292 = vsub.s32 %v289, %v291
    %v293 = vrot.slane %v282, %v292
    %v295 = vunpack.c.l.s4 1983009808
    %v296 = vunpack.c.0.s8 %v295
    %v297 = vlaneseq
    %v298 = vshrl.u32 %v297, 7
    %v299 = vsub.s32 %v296, %v298
    %v300 = vrot.slane %v286, %v299
    %v301 = vcombine.high %v293, %v293
    %v302 = vcombine.high %v300, %v300
    %v303 = vcombine.high %v283, %v283
    %v305 = vunpack.c.l.s4 1983009808
    %v306 = vunpack.c.0.s8 %v305
    %v307 = vlaneseq
    %v308 = vshrl.u32 %v307, 7
    %v309 = vsub.s32 %v306, %v308
    %v310 = vrot.slane %v283, %v309
    %v312 = vunpack.c.l.s4 1983009808
    %v313 = vunpack.c.0.s8 %v312
    %v314 = vlaneseq
    %v315 = vshrl.u32 %v314, 7
    %v316 = vsub.s32 %v313, %v315
    %v317 = vrot.slane %v303, %v316
    %v318 = vcombine.high %v310, %v310
    %v319 = vcombine.high %v317, %v317
    %v328 = vpack.c.bf16 %v293, %v293
    %v329 = vpack.c.bf16 %v301, %v301
    %v330 = vpack.c.bf16 %v300, %v300
    %v331 = vpack.c.bf16 %v302, %v302
    %v332 = vpack.c.bf16 %v310, %v310
    %v333 = vpack.c.bf16 %v318, %v318
    %v334 = vpack.c.bf16 %v317, %v317
    %v335 = vpack.c.bf16 %v319, %v319
    %s336 = scalar_lea.vmem [#allocation2], 512
    %v337 = vld [vmem:[%s336] sm:$0xf]
    %v338 = vld [vmem:[%s336 + $0x4] sm:$0xf]
    %v339 = vld [vmem:[%s336 + $0x8] sm:$0xf]
    %v340 = vld [vmem:[%s336 + $0xc] sm:$0xf]
    %v341 = vld [vmem:[%s336 + $0x10] sm:$0xf]
    %v342 = vld [vmem:[%s336 + $0x14] sm:$0xf]
    %v343 = vld [vmem:[%s336 + $0x18] sm:$0xf]
    %v344 = vld [vmem:[%s336 + $0x1c] sm:$0xf]
    %v345 = vld [vmem:[%s336 + $0x20] sm:$0xf]
    %v346 = vld [vmem:[%s336 + $0x24] sm:$0xf]
    %v347 = vld [vmem:[%s336 + $0x28] sm:$0xf]
    %v348 = vld [vmem:[%s336 + $0x2c] sm:$0xf]
    %v349 = vld [vmem:[%s336 + $0x30] sm:$0xf]
    %v350 = vld [vmem:[%s336 + $0x34] sm:$0xf]
    %v351 = vld [vmem:[%s336 + $0x38] sm:$0xf]
    %v352 = vld [vmem:[%s336 + $0x3c] sm:$0xf]
    %v353 = vld [vmem:[%s336 + $0x40] sm:$0xf]
    %v354 = vld [vmem:[%s336 + $0x44] sm:$0xf]
    %v355 = vld [vmem:[%s336 + $0x48] sm:$0xf]
    %v356 = vld [vmem:[%s336 + $0x4c] sm:$0xf]
    %v357 = vld [vmem:[%s336 + $0x50] sm:$0xf]
    %v358 = vld [vmem:[%s336 + $0x54] sm:$0xf]
    %v359 = vld [vmem:[%s336 + $0x58] sm:$0xf]
    %v360 = vld [vmem:[%s336 + $0x5c] sm:$0xf]
    %v361 = vld [vmem:[%s336 + $0x60] sm:$0xf]
    %v362 = vld [vmem:[%s336 + $0x64] sm:$0xf]
    %v363 = vld [vmem:[%s336 + $0x68] sm:$0xf]
    %v364 = vld [vmem:[%s336 + $0x6c] sm:$0xf]
    %v365 = vld [vmem:[%s336 + $0x70] sm:$0xf]
    %v366 = vld [vmem:[%s336 + $0x74] sm:$0xf]
    %v367 = vld [vmem:[%s336 + $0x78] sm:$0xf]
    %v368 = vld [vmem:[%s336 + $0x7c] sm:$0xf]
    %v369 = vld [vmem:[%s336 + $0x80] sm:$0xf]
    %v370 = vld [vmem:[%s336 + $0x84] sm:$0xf]
    %v371 = vld [vmem:[%s336 + $0x88] sm:$0xf]
    %v372 = vld [vmem:[%s336 + $0x8c] sm:$0xf]
    %v373 = vld [vmem:[%s336 + $0x90] sm:$0xf]
    %v374 = vld [vmem:[%s336 + $0x94] sm:$0xf]
    %v375 = vld [vmem:[%s336 + $0x98] sm:$0xf]
    %v376 = vld [vmem:[%s336 + $0x9c] sm:$0xf]
    %v377 = vld [vmem:[%s336 + $0xa0] sm:$0xf]
    %v378 = vld [vmem:[%s336 + $0xa4] sm:$0xf]
    %v379 = vld [vmem:[%s336 + $0xa8] sm:$0xf]
    %v380 = vld [vmem:[%s336 + $0xac] sm:$0xf]
    %v381 = vld [vmem:[%s336 + $0xb0] sm:$0xf]
    %v382 = vld [vmem:[%s336 + $0xb4] sm:$0xf]
    %v383 = vld [vmem:[%s336 + $0xb8] sm:$0xf]
    %v384 = vld [vmem:[%s336 + $0xbc] sm:$0xf]
    %v385 = vld [vmem:[%s336 + $0xc0] sm:$0xf]
    %v386 = vld [vmem:[%s336 + $0xc4] sm:$0xf]
    %v387 = vld [vmem:[%s336 + $0xc8] sm:$0xf]
    %v388 = vld [vmem:[%s336 + $0xcc] sm:$0xf]
    %v389 = vld [vmem:[%s336 + $0xd0] sm:$0xf]
    %v390 = vld [vmem:[%s336 + $0xd4] sm:$0xf]
    %v391 = vld [vmem:[%s336 + $0xd8] sm:$0xf]
    %v392 = vld [vmem:[%s336 + $0xdc] sm:$0xf]
    %v393 = vld [vmem:[%s336 + $0xe0] sm:$0xf]
    %v394 = vld [vmem:[%s336 + $0xe4] sm:$0xf]
    %v395 = vld [vmem:[%s336 + $0xe8] sm:$0xf]
    %v396 = vld [vmem:[%s336 + $0xec] sm:$0xf]
    %v397 = vld [vmem:[%s336 + $0xf0] sm:$0xf]
    %v398 = vld [vmem:[%s336 + $0xf4] sm:$0xf]
    %v399 = vld [vmem:[%s336 + $0xf8] sm:$0xf]
    %v400 = vld [vmem:[%s336 + $0xfc] sm:$0xf]
    %v401 = vld [vmem:[%s336 + $0x100] sm:$0xf]
    %v402 = vld [vmem:[%s336 + $0x104] sm:$0xf]
    %v403 = vld [vmem:[%s336 + $0x108] sm:$0xf]
    %v404 = vld [vmem:[%s336 + $0x10c] sm:$0xf]
    %v405 = vld [vmem:[%s336 + $0x110] sm:$0xf]
    %v406 = vld [vmem:[%s336 + $0x114] sm:$0xf]
    %v407 = vld [vmem:[%s336 + $0x118] sm:$0xf]
    %v408 = vld [vmem:[%s336 + $0x11c] sm:$0xf]
    %v409 = vld [vmem:[%s336 + $0x120] sm:$0xf]
    %v410 = vld [vmem:[%s336 + $0x124] sm:$0xf]
    %v411 = vld [vmem:[%s336 + $0x128] sm:$0xf]
    %v412 = vld [vmem:[%s336 + $0x12c] sm:$0xf]
    %v413 = vld [vmem:[%s336 + $0x130] sm:$0xf]
    %v414 = vld [vmem:[%s336 + $0x134] sm:$0xf]
    %v415 = vld [vmem:[%s336 + $0x138] sm:$0xf]
    %v416 = vld [vmem:[%s336 + $0x13c] sm:$0xf]
    %v417 = vld [vmem:[%s336 + $0x140] sm:$0xf]
    %v418 = vld [vmem:[%s336 + $0x144] sm:$0xf]
    %v419 = vld [vmem:[%s336 + $0x148] sm:$0xf]
    %v420 = vld [vmem:[%s336 + $0x14c] sm:$0xf]
    %v421 = vld [vmem:[%s336 + $0x150] sm:$0xf]
    %v422 = vld [vmem:[%s336 + $0x154] sm:$0xf]
    %v423 = vld [vmem:[%s336 + $0x158] sm:$0xf]
    %v424 = vld [vmem:[%s336 + $0x15c] sm:$0xf]
    %v425 = vld [vmem:[%s336 + $0x160] sm:$0xf]
    %v426 = vld [vmem:[%s336 + $0x164] sm:$0xf]
    %v427 = vld [vmem:[%s336 + $0x168] sm:$0xf]
    %v428 = vld [vmem:[%s336 + $0x16c] sm:$0xf]
    %v429 = vld [vmem:[%s336 + $0x170] sm:$0xf]
    %v430 = vld [vmem:[%s336 + $0x174] sm:$0xf]
    %v431 = vld [vmem:[%s336 + $0x178] sm:$0xf]
    %v432 = vld [vmem:[%s336 + $0x17c] sm:$0xf]
    %v433 = vld [vmem:[%s336 + $0x180] sm:$0xf]
    %v434 = vld [vmem:[%s336 + $0x184] sm:$0xf]
    %v435 = vld [vmem:[%s336 + $0x188] sm:$0xf]
    %v436 = vld [vmem:[%s336 + $0x18c] sm:$0xf]
    %v437 = vld [vmem:[%s336 + $0x190] sm:$0xf]
    %v438 = vld [vmem:[%s336 + $0x194] sm:$0xf]
    %v439 = vld [vmem:[%s336 + $0x198] sm:$0xf]
    %v440 = vld [vmem:[%s336 + $0x19c] sm:$0xf]
    %v441 = vld [vmem:[%s336 + $0x1a0] sm:$0xf]
    %v442 = vld [vmem:[%s336 + $0x1a4] sm:$0xf]
    %v443 = vld [vmem:[%s336 + $0x1a8] sm:$0xf]
    %v444 = vld [vmem:[%s336 + $0x1ac] sm:$0xf]
    %v445 = vld [vmem:[%s336 + $0x1b0] sm:$0xf]
    %v446 = vld [vmem:[%s336 + $0x1b4] sm:$0xf]
    %v447 = vld [vmem:[%s336 + $0x1b8] sm:$0xf]
    %v448 = vld [vmem:[%s336 + $0x1bc] sm:$0xf]
    %v449 = vld [vmem:[%s336 + $0x1c0] sm:$0xf]
    %v450 = vld [vmem:[%s336 + $0x1c4] sm:$0xf]
    %v451 = vld [vmem:[%s336 + $0x1c8] sm:$0xf]
    %v452 = vld [vmem:[%s336 + $0x1cc] sm:$0xf]
    %v453 = vld [vmem:[%s336 + $0x1d0] sm:$0xf]
    %v454 = vld [vmem:[%s336 + $0x1d4] sm:$0xf]
    %v455 = vld [vmem:[%s336 + $0x1d8] sm:$0xf]
    %v456 = vld [vmem:[%s336 + $0x1dc] sm:$0xf]
    %v457 = vld [vmem:[%s336 + $0x1e0] sm:$0xf]
    %v458 = vld [vmem:[%s336 + $0x1e4] sm:$0xf]
    %v459 = vld [vmem:[%s336 + $0x1e8] sm:$0xf]
    %v460 = vld [vmem:[%s336 + $0x1ec] sm:$0xf]
    %v461 = vld [vmem:[%s336 + $0x1f0] sm:$0xf]
    %v462 = vld [vmem:[%s336 + $0x1f4] sm:$0xf]
    %v463 = vld [vmem:[%s336 + $0x1f8] sm:$0xf]
    %v464 = vld [vmem:[%s336 + $0x1fc] sm:$0xf]
    %v465 = vld [vmem:[%s3] sm:$0x1]
    %v467 = vlaneseq
    %v468 = vshrl.u32 %v467, 7
    %v469 = vsub.s32 0, %v468
    %v470 = vrot.slane %v465, %v469
    %v600 = vunpack.c.l.b16 %v154
    %v601 = vunpack.c.l.b16 %v155
    %v602 = vunpack.c.l.b16 %v156
    %v603 = vunpack.c.l.b16 %v157
    %v604 = vunpack.c.l.b16 %v158
    %v605 = vunpack.c.l.b16 %v159
    %v606 = vunpack.c.l.b16 %v160
    %v607 = vunpack.c.l.b16 %v161
    %v608 = vunpack.c.l.b16 %v162
    %v609 = vunpack.c.l.b16 %v163
    %v610 = vunpack.c.l.b16 %v164
    %v611 = vunpack.c.l.b16 %v165
    %v612 = vunpack.c.l.b16 %v166
    %v613 = vunpack.c.l.b16 %v167
    %v614 = vunpack.c.l.b16 %v168
    %v615 = vunpack.c.l.b16 %v169
    %v616 = vunpack.c.l.b16 %v170
    %v617 = vunpack.c.l.b16 %v171
    %v618 = vunpack.c.l.b16 %v172
    %v619 = vunpack.c.l.b16 %v173
    %v620 = vunpack.c.l.b16 %v174
    %v621 = vunpack.c.l.b16 %v175
    %v622 = vunpack.c.l.b16 %v176
    %v623 = vunpack.c.l.b16 %v177
    %v624 = vunpack.c.l.b16 %v178
    %v625 = vunpack.c.l.b16 %v179
    %v626 = vunpack.c.l.b16 %v180
    %v627 = vunpack.c.l.b16 %v181
    %v628 = vunpack.c.l.b16 %v182
    %v629 = vunpack.c.l.b16 %v183
    %v630 = vunpack.c.l.b16 %v184
    %v631 = vunpack.c.l.b16 %v185
    %v632 = vunpack.c.l.b16 %v186
    %v633 = vunpack.c.l.b16 %v187
    %v634 = vunpack.c.l.b16 %v188
    %v635 = vunpack.c.l.b16 %v189
    %v636 = vunpack.c.l.b16 %v190
    %v637 = vunpack.c.l.b16 %v191
    %v638 = vunpack.c.l.b16 %v192
    %v639 = vunpack.c.l.b16 %v193
    %v640 = vunpack.c.l.b16 %v194
    %v641 = vunpack.c.l.b16 %v195
    %v642 = vunpack.c.l.b16 %v196
    %v643 = vunpack.c.l.b16 %v197
    %v644 = vunpack.c.l.b16 %v198
    %v645 = vunpack.c.l.b16 %v199
    %v646 = vunpack.c.l.b16 %v200
    %v647 = vunpack.c.l.b16 %v201
    %v648 = vunpack.c.l.b16 %v202
    %v649 = vunpack.c.l.b16 %v203
    %v650 = vunpack.c.l.b16 %v204
    %v651 = vunpack.c.l.b16 %v205
    %v652 = vunpack.c.l.b16 %v206
    %v653 = vunpack.c.l.b16 %v207
    %v654 = vunpack.c.l.b16 %v208
    %v655 = vunpack.c.l.b16 %v209
    %v656 = vunpack.c.l.b16 %v210
    %v657 = vunpack.c.l.b16 %v211
    %v658 = vunpack.c.l.b16 %v212
    %v659 = vunpack.c.l.b16 %v213
    %v660 = vunpack.c.l.b16 %v214
    %v661 = vunpack.c.l.b16 %v215
    %v662 = vunpack.c.l.b16 %v216
    %v663 = vunpack.c.l.b16 %v217
    %v664 = vunpack.c.l.b16 %v218
    %v665 = vunpack.c.l.b16 %v219
    %v666 = vunpack.c.l.b16 %v220
    %v667 = vunpack.c.l.b16 %v221
    %v668 = vunpack.c.l.b16 %v222
    %v669 = vunpack.c.l.b16 %v223
    %v670 = vunpack.c.l.b16 %v224
    %v671 = vunpack.c.l.b16 %v225
    %v672 = vunpack.c.l.b16 %v226
    %v673 = vunpack.c.l.b16 %v227
    %v674 = vunpack.c.l.b16 %v228
    %v675 = vunpack.c.l.b16 %v229
    %v676 = vunpack.c.l.b16 %v230
    %v677 = vunpack.c.l.b16 %v231
    %v678 = vunpack.c.l.b16 %v232
    %v679 = vunpack.c.l.b16 %v233
    %v680 = vunpack.c.l.b16 %v234
    %v681 = vunpack.c.l.b16 %v235
    %v682 = vunpack.c.l.b16 %v236
    %v683 = vunpack.c.l.b16 %v237
    %v684 = vunpack.c.l.b16 %v238
    %v685 = vunpack.c.l.b16 %v239
    %v686 = vunpack.c.l.b16 %v240
    %v687 = vunpack.c.l.b16 %v241
    %v688 = vunpack.c.l.b16 %v242
    %v689 = vunpack.c.l.b16 %v243
    %v690 = vunpack.c.l.b16 %v244
    %v691 = vunpack.c.l.b16 %v245
    %v692 = vunpack.c.l.b16 %v246
    %v693 = vunpack.c.l.b16 %v247
    %v694 = vunpack.c.l.b16 %v248
    %v695 = vunpack.c.l.b16 %v249
    %v696 = vunpack.c.l.b16 %v250
    %v697 = vunpack.c.l.b16 %v251
    %v698 = vunpack.c.l.b16 %v252
    %v699 = vunpack.c.l.b16 %v253
    %v700 = vunpack.c.l.b16 %v254
    %v701 = vunpack.c.l.b16 %v255
    %v702 = vunpack.c.l.b16 %v256
    %v703 = vunpack.c.l.b16 %v257
    %v704 = vunpack.c.l.b16 %v258
    %v705 = vunpack.c.l.b16 %v259
    %v706 = vunpack.c.l.b16 %v260
    %v707 = vunpack.c.l.b16 %v261
    %v708 = vunpack.c.l.b16 %v262
    %v709 = vunpack.c.l.b16 %v263
    %v710 = vunpack.c.l.b16 %v264
    %v711 = vunpack.c.l.b16 %v265
    %v712 = vunpack.c.l.b16 %v266
    %v713 = vunpack.c.l.b16 %v267
    %v714 = vunpack.c.l.b16 %v268
    %v715 = vunpack.c.l.b16 %v269
    %v716 = vunpack.c.l.b16 %v270
    %v717 = vunpack.c.l.b16 %v271
    %v718 = vunpack.c.l.b16 %v272
    %v719 = vunpack.c.l.b16 %v273
    %v720 = vunpack.c.l.b16 %v274
    %v721 = vunpack.c.l.b16 %v275
    %v722 = vunpack.c.l.b16 %v276
    %v723 = vunpack.c.l.b16 %v277
    %v724 = vunpack.c.l.b16 %v278
    %v725 = vunpack.c.l.b16 %v279
    %v726 = vunpack.c.l.b16 %v280
    %v727 = vunpack.c.l.b16 %v281
    %v728 = vpack.c.b16 %v601, %v600
    %v729 = vpack.c.b16 %v603, %v602
    %v730 = vpack.c.b16 %v605, %v604
    %v731 = vpack.c.b16 %v607, %v606
    %v732 = vpack.c.b16 %v609, %v608
    %v733 = vpack.c.b16 %v611, %v610
    %v734 = vpack.c.b16 %v613, %v612
    %v735 = vpack.c.b16 %v615, %v614
    %v736 = vpack.c.b16 %v617, %v616
    %v737 = vpack.c.b16 %v619, %v618
    %v738 = vpack.c.b16 %v621, %v620
    %v739 = vpack.c.b16 %v623, %v622
    %v740 = vpack.c.b16 %v625, %v624
    %v741 = vpack.c.b16 %v627, %v626
    %v742 = vpack.c.b16 %v629, %v628
    %v743 = vpack.c.b16 %v631, %v630
    %v744 = vpack.c.b16 %v633, %v632
    %v745 = vpack.c.b16 %v635, %v634
    %v746 = vpack.c.b16 %v637, %v636
    %v747 = vpack.c.b16 %v639, %v638
    %v748 = vpack.c.b16 %v641, %v640
    %v749 = vpack.c.b16 %v643, %v642
    %v750 = vpack.c.b16 %v645, %v644
    %v751 = vpack.c.b16 %v647, %v646
    %v752 = vpack.c.b16 %v649, %v648
    %v753 = vpack.c.b16 %v651, %v650
    %v754 = vpack.c.b16 %v653, %v652
    %v755 = vpack.c.b16 %v655, %v654
    %v756 = vpack.c.b16 %v657, %v656
    %v757 = vpack.c.b16 %v659, %v658
    %v758 = vpack.c.b16 %v661, %v660
    %v759 = vpack.c.b16 %v663, %v662
    %v760 = vpack.c.b16 %v665, %v664
    %v761 = vpack.c.b16 %v667, %v666
    %v762 = vpack.c.b16 %v669, %v668
    %v763 = vpack.c.b16 %v671, %v670
    %v764 = vpack.c.b16 %v673, %v672
    %v765 = vpack.c.b16 %v675, %v674
    %v766 = vpack.c.b16 %v677, %v676
    %v767 = vpack.c.b16 %v679, %v678
    %v768 = vpack.c.b16 %v681, %v680
    %v769 = vpack.c.b16 %v683, %v682
    %v770 = vpack.c.b16 %v685, %v684
    %v771 = vpack.c.b16 %v687, %v686
    %v772 = vpack.c.b16 %v689, %v688
    %v773 = vpack.c.b16 %v691, %v690
    %v774 = vpack.c.b16 %v693, %v692
    %v775 = vpack.c.b16 %v695, %v694
    %v776 = vpack.c.b16 %v697, %v696
    %v777 = vpack.c.b16 %v699, %v698
    %v778 = vpack.c.b16 %v701, %v700
    %v779 = vpack.c.b16 %v703, %v702
    %v780 = vpack.c.b16 %v705, %v704
    %v781 = vpack.c.b16 %v707, %v706
    %v782 = vpack.c.b16 %v709, %v708
    %v783 = vpack.c.b16 %v711, %v710
    %v784 = vpack.c.b16 %v713, %v712
    %v785 = vpack.c.b16 %v715, %v714
    %v786 = vpack.c.b16 %v717, %v716
    %v787 = vpack.c.b16 %v719, %v718
    %v788 = vpack.c.b16 %v721, %v720
    %v789 = vpack.c.b16 %v723, %v722
    %v790 = vpack.c.b16 %v725, %v724
    %v791 = vpack.c.b16 %v727, %v726
    %856 = vmatprep.subr.bf16.mxu0 0
    %857 = vmatpush1.bf16.msra.mxu0 %v728
    %858 = vmatprep.subr.bf16.mxu0 0
    %859 = vmatpush1.bf16.msra.mxu0 %v729
    %860 = vmatprep.subr.bf16.mxu0 0
    %861 = vmatpush1.bf16.msra.mxu0 %v730
    %862 = vmatprep.subr.bf16.mxu0 0
    %863 = vmatpush1.bf16.msra.mxu0 %v731
    %864 = vmatprep.subr.bf16.mxu0 0
    %865 = vmatpush1.bf16.msra.mxu0 %v732
    %866 = vmatprep.subr.bf16.mxu0 0
    %867 = vmatpush1.bf16.msra.mxu0 %v733
    %868 = vmatprep.subr.bf16.mxu0 0
    %869 = vmatpush1.bf16.msra.mxu0 %v734
    %870 = vmatprep.subr.bf16.mxu0 0
    %871 = vmatpush1.bf16.msra.mxu0 %v735
    %872 = vmatprep.subr.bf16.mxu0 0
    %873 = vmatpush1.bf16.msra.mxu0 %v736
    %874 = vmatprep.subr.bf16.mxu0 0
    %875 = vmatpush1.bf16.msra.mxu0 %v737
    %876 = vmatprep.subr.bf16.mxu0 0
    %877 = vmatpush1.bf16.msra.mxu0 %v738
    %878 = vmatprep.subr.bf16.mxu0 0
    %879 = vmatpush1.bf16.msra.mxu0 %v739
    %880 = vmatprep.subr.bf16.mxu0 0
    %881 = vmatpush1.bf16.msra.mxu0 %v740
    %882 = vmatprep.subr.bf16.mxu0 0
    %883 = vmatpush1.bf16.msra.mxu0 %v741
    %884 = vmatprep.subr.bf16.mxu0 0
    %885 = vmatpush1.bf16.msra.mxu0 %v742
    %886 = vmatprep.subr.bf16.mxu0 0
    %887 = vmatpush1.bf16.msra.mxu0 %v743
    %888 = vmatprep.mubr.bf16.mxu0 %v147
    %889 = vmatmul.mubr.bf16.gmra.mrb[0].mxu0 %v146
    %v890 = vpop.f32.mrb[0].mxu0
    %v891 = vadd.f32 %v470, %v890
    %v892 = vpop.f32.mrb[0].mxu0
    %v893 = vpop.f32.mrb[0].mxu0
    %v894 = vpop.f32.mrb[0].mxu0
    %895 = vdwg.mxu0
    %896 = vmatprep.subr.bf16.mxu0 0
    %897 = vmatpush1.bf16.msra.mxu0 %v744
    %898 = vmatprep.subr.bf16.mxu0 0
    %899 = vmatpush1.bf16.msra.mxu0 %v745
    %900 = vmatprep.subr.bf16.mxu0 0
    %901 = vmatpush1.bf16.msra.mxu0 %v746
    %902 = vmatprep.subr.bf16.mxu0 0
    %903 = vmatpush1.bf16.msra.mxu0 %v747
    %904 = vmatprep.subr.bf16.mxu0 0
    %905 = vmatpush1.bf16.msra.mxu0 %v748
    %906 = vmatprep.subr.bf16.mxu0 0
    %907 = vmatpush1.bf16.msra.mxu0 %v749
    %908 = vmatprep.subr.bf16.mxu0 0
    %909 = vmatpush1.bf16.msra.mxu0 %v750
    %910 = vmatprep.subr.bf16.mxu0 0
    %911 = vmatpush1.bf16.msra.mxu0 %v751
    %912 = vmatprep.subr.bf16.mxu0 0
    %913 = vmatpush1.bf16.msra.mxu0 %v752
    %914 = vmatprep.subr.bf16.mxu0 0
    %915 = vmatpush1.bf16.msra.mxu0 %v753
    %916 = vmatprep.subr.bf16.mxu0 0
    %917 = vmatpush1.bf16.msra.mxu0 %v754
    %918 = vmatprep.subr.bf16.mxu0 0
    %919 = vmatpush1.bf16.msra.mxu0 %v755
    %920 = vmatprep.subr.bf16.mxu0 0
    %921 = vmatpush1.bf16.msra.mxu0 %v756
    %922 = vmatprep.subr.bf16.mxu0 0
    %923 = vmatpush1.bf16.msra.mxu0 %v757
    %924 = vmatprep.subr.bf16.mxu0 0
    %925 = vmatpush1.bf16.msra.mxu0 %v758
    %926 = vmatprep.subr.bf16.mxu0 0
    %927 = vmatpush1.bf16.msra.mxu0 %v759
    %928 = vmatprep.mubr.bf16.mxu0 %v149
    %929 = vmatmul.mubr.bf16.gmra.mrb[0].mxu0 %v148
    %v930 = vpop.f32.mrb[0].mxu0
    %v931 = vadd.f32 %v891, %v930
    %v932 = vpop.f32.mrb[0].mxu0
    %v933 = vpop.f32.mrb[0].mxu0
    %v934 = vpop.f32.mrb[0].mxu0
    %935 = vdwg.mxu0
    %936 = vmatprep.subr.bf16.mxu0 0
    %937 = vmatpush1.bf16.msra.mxu0 %v760
    %938 = vmatprep.subr.bf16.mxu0 0
    %939 = vmatpush1.bf16.msra.mxu0 %v761
    %940 = vmatprep.subr.bf16.mxu0 0
    %941 = vmatpush1.bf16.msra.mxu0 %v762
    %942 = vmatprep.subr.bf16.mxu0 0
    %943 = vmatpush1.bf16.msra.mxu0 %v763
    %944 = vmatprep.subr.bf16.mxu0 0
    %945 = vmatpush1.bf16.msra.mxu0 %v764
    %946 = vmatprep.subr.bf16.mxu0 0
    %947 = vmatpush1.bf16.msra.mxu0 %v765
    %948 = vmatprep.subr.bf16.mxu0 0
    %949 = vmatpush1.bf16.msra.mxu0 %v766
    %950 = vmatprep.subr.bf16.mxu0 0
    %951 = vmatpush1.bf16.msra.mxu0 %v767
    %952 = vmatprep.subr.bf16.mxu0 0
    %953 = vmatpush1.bf16.msra.mxu0 %v768
    %954 = vmatprep.subr.bf16.mxu0 0
    %955 = vmatpush1.bf16.msra.mxu0 %v769
    %956 = vmatprep.subr.bf16.mxu0 0
    %957 = vmatpush1.bf16.msra.mxu0 %v770
    %958 = vmatprep.subr.bf16.mxu0 0
    %959 = vmatpush1.bf16.msra.mxu0 %v771
    %960 = vmatprep.subr.bf16.mxu0 0
    %961 = vmatpush1.bf16.msra.mxu0 %v772
    %962 = vmatprep.subr.bf16.mxu0 0
    %963 = vmatpush1.bf16.msra.mxu0 %v773
    %964 = vmatprep.subr.bf16.mxu0 0
    %965 = vmatpush1.bf16.msra.mxu0 %v774
    %966 = vmatprep.subr.bf16.mxu0 0
    %967 = vmatpush1.bf16.msra.mxu0 %v775
    %968 = vmatprep.mubr.bf16.mxu0 %v151
    %969 = vmatmul.mubr.bf16.gmra.mrb[0].mxu0 %v150
    %v970 = vpop.f32.mrb[0].mxu0
    %v971 = vadd.f32 %v931, %v970
    %v972 = vpop.f32.mrb[0].mxu0
    %v973 = vpop.f32.mrb[0].mxu0
    %v974 = vpop.f32.mrb[0].mxu0
    %975 = vdwg.mxu0
    %976 = vmatprep.subr.bf16.mxu0 0
    %977 = vmatpush1.bf16.msra.mxu0 %v776
    %978 = vmatprep.subr.bf16.mxu0 0
    %979 = vmatpush1.bf16.msra.mxu0 %v777
    %980 = vmatprep.subr.bf16.mxu0 0
    %981 = vmatpush1.bf16.msra.mxu0 %v778
    %982 = vmatprep.subr.bf16.mxu0 0
    %983 = vmatpush1.bf16.msra.mxu0 %v779
    %984 = vmatprep.subr.bf16.mxu0 0
    %985 = vmatpush1.bf16.msra.mxu0 %v780
    %986 = vmatprep.subr.bf16.mxu0 0
    %987 = vmatpush1.bf16.msra.mxu0 %v781
    %988 = vmatprep.subr.bf16.mxu0 0
    %989 = vmatpush1.bf16.msra.mxu0 %v782
    %990 = vmatprep.subr.bf16.mxu0 0
    %991 = vmatpush1.bf16.msra.mxu0 %v783
    %992 = vmatprep.subr.bf16.mxu0 0
    %993 = vmatpush1.bf16.msra.mxu0 %v784
    %994 = vmatprep.subr.bf16.mxu0 0
    %995 = vmatpush1.bf16.msra.mxu0 %v785
    %996 = vmatprep.subr.bf16.mxu0 0
    %997 = vmatpush1.bf16.msra.mxu0 %v786
    %998 = vmatprep.subr.bf16.mxu0 0
    %999 = vmatpush1.bf16.msra.mxu0 %v787
    %1000 = vmatprep.subr.bf16.mxu0 0
    %1001 = vmatpush1.bf16.msra.mxu0 %v788
    %1002 = vmatprep.subr.bf16.mxu0 0
    %1003 = vmatpush1.bf16.msra.mxu0 %v789
    %1004 = vmatprep.subr.bf16.mxu0 0
    %1005 = vmatpush1.bf16.msra.mxu0 %v790
    %1006 = vmatprep.subr.bf16.mxu0 0
    %1007 = vmatpush1.bf16.msra.mxu0 %v791
    %1008 = vmatprep.mubr.bf16.mxu0 %v153
    %1009 = vmatmul.mubr.bf16.gmra.mrb[0].mxu0 %v152
    %v1010 = vpop.f32.mrb[0].mxu0
    %v1011 = vadd.f32 %v971, %v1010
    %v1012 = vpop.f32.mrb[0].mxu0
    %v1013 = vpop.f32.mrb[0].mxu0
    %v1014 = vpop.f32.mrb[0].mxu0
    %1015 = vdwg.mxu0
    %v1016 = vmax.f32 %v1011, 0.0
    %v1017 = vpack.c.bf16 %v1016, %v1016
    %s1018 = scalar_lea.vmem %s3, 1
    %v1019 = vld [vmem:[%s1018] sm:$0x1]
    %v1021 = vlaneseq
    %v1022 = vshrl.u32 %v1021, 7
    %v1023 = vsub.s32 0, %v1022
    %v1024 = vrot.slane %v1019, %v1023
    %v1154 = vunpack.c.l.b16 %v337
    %v1155 = vunpack.c.l.b16 %v338
    %v1156 = vunpack.c.l.b16 %v339
    %v1157 = vunpack.c.l.b16 %v340
    %v1158 = vunpack.c.l.b16 %v341
    %v1159 = vunpack.c.l.b16 %v342
    %v1160 = vunpack.c.l.b16 %v343
    %v1161 = vunpack.c.l.b16 %v344
    %v1162 = vunpack.c.l.b16 %v345
    %v1163 = vunpack.c.l.b16 %v346
    %v1164 = vunpack.c.l.b16 %v347
    %v1165 = vunpack.c.l.b16 %v348
    %v1166 = vunpack.c.l.b16 %v349
    %v1167 = vunpack.c.l.b16 %v350
    %v1168 = vunpack.c.l.b16 %v351
    %v1169 = vunpack.c.l.b16 %v352
    %v1170 = vunpack.c.l.b16 %v353
    %v1171 = vunpack.c.l.b16 %v354
    %v1172 = vunpack.c.l.b16 %v355
    %v1173 = vunpack.c.l.b16 %v356
    %v1174 = vunpack.c.l.b16 %v357
    %v1175 = vunpack.c.l.b16 %v358
    %v1176 = vunpack.c.l.b16 %v359
    %v1177 = vunpack.c.l.b16 %v360
    %v1178 = vunpack.c.l.b16 %v361
    %v1179 = vunpack.c.l.b16 %v362
    %v1180 = vunpack.c.l.b16 %v363
    %v1181 = vunpack.c.l.b16 %v364
    %v1182 = vunpack.c.l.b16 %v365
    %v1183 = vunpack.c.l.b16 %v366
    %v1184 = vunpack.c.l.b16 %v367
    %v1185 = vunpack.c.l.b16 %v368
    %v1186 = vunpack.c.l.b16 %v369
    %v1187 = vunpack.c.l.b16 %v370
    %v1188 = vunpack.c.l.b16 %v371
    %v1189 = vunpack.c.l.b16 %v372
    %v1190 = vunpack.c.l.b16 %v373
    %v1191 = vunpack.c.l.b16 %v374
    %v1192 = vunpack.c.l.b16 %v375
    %v1193 = vunpack.c.l.b16 %v376
    %v1194 = vunpack.c.l.b16 %v377
    %v1195 = vunpack.c.l.b16 %v378
    %v1196 = vunpack.c.l.b16 %v379
    %v1197 = vunpack.c.l.b16 %v380
    %v1198 = vunpack.c.l.b16 %v381
    %v1199 = vunpack.c.l.b16 %v382
    %v1200 = vunpack.c.l.b16 %v383
    %v1201 = vunpack.c.l.b16 %v384
    %v1202 = vunpack.c.l.b16 %v385
    %v1203 = vunpack.c.l.b16 %v386
    %v1204 = vunpack.c.l.b16 %v387
    %v1205 = vunpack.c.l.b16 %v388
    %v1206 = vunpack.c.l.b16 %v389
    %v1207 = vunpack.c.l.b16 %v390
    %v1208 = vunpack.c.l.b16 %v391
    %v1209 = vunpack.c.l.b16 %v392
    %v1210 = vunpack.c.l.b16 %v393
    %v1211 = vunpack.c.l.b16 %v394
    %v1212 = vunpack.c.l.b16 %v395
    %v1213 = vunpack.c.l.b16 %v396
    %v1214 = vunpack.c.l.b16 %v397
    %v1215 = vunpack.c.l.b16 %v398
    %v1216 = vunpack.c.l.b16 %v399
    %v1217 = vunpack.c.l.b16 %v400
    %v1218 = vunpack.c.l.b16 %v401
    %v1219 = vunpack.c.l.b16 %v402
    %v1220 = vunpack.c.l.b16 %v403
    %v1221 = vunpack.c.l.b16 %v404
    %v1222 = vunpack.c.l.b16 %v405
    %v1223 = vunpack.c.l.b16 %v406
    %v1224 = vunpack.c.l.b16 %v407
    %v1225 = vunpack.c.l.b16 %v408
    %v1226 = vunpack.c.l.b16 %v409
    %v1227 = vunpack.c.l.b16 %v410
    %v1228 = vunpack.c.l.b16 %v411
    %v1229 = vunpack.c.l.b16 %v412
    %v1230 = vunpack.c.l.b16 %v413
    %v1231 = vunpack.c.l.b16 %v414
    %v1232 = vunpack.c.l.b16 %v415
    %v1233 = vunpack.c.l.b16 %v416
    %v1234 = vunpack.c.l.b16 %v417
    %v1235 = vunpack.c.l.b16 %v418
    %v1236 = vunpack.c.l.b16 %v419
    %v1237 = vunpack.c.l.b16 %v420
    %v1238 = vunpack.c.l.b16 %v421
    %v1239 = vunpack.c.l.b16 %v422
    %v1240 = vunpack.c.l.b16 %v423
    %v1241 = vunpack.c.l.b16 %v424
    %v1242 = vunpack.c.l.b16 %v425
    %v1243 = vunpack.c.l.b16 %v426
    %v1244 = vunpack.c.l.b16 %v427
    %v1245 = vunpack.c.l.b16 %v428
    %v1246 = vunpack.c.l.b16 %v429
    %v1247 = vunpack.c.l.b16 %v430
    %v1248 = vunpack.c.l.b16 %v431
    %v1249 = vunpack.c.l.b16 %v432
    %v1250 = vunpack.c.l.b16 %v433
    %v1251 = vunpack.c.l.b16 %v434
    %v1252 = vunpack.c.l.b16 %v435
    %v1253 = vunpack.c.l.b16 %v436
    %v1254 = vunpack.c.l.b16 %v437
    %v1255 = vunpack.c.l.b16 %v438
    %v1256 = vunpack.c.l.b16 %v439
    %v1257 = vunpack.c.l.b16 %v440
    %v1258 = vunpack.c.l.b16 %v441
    %v1259 = vunpack.c.l.b16 %v442
    %v1260 = vunpack.c.l.b16 %v443
    %v1261 = vunpack.c.l.b16 %v444
    %v1262 = vunpack.c.l.b16 %v445
    %v1263 = vunpack.c.l.b16 %v446
    %v1264 = vunpack.c.l.b16 %v447
    %v1265 = vunpack.c.l.b16 %v448
    %v1266 = vunpack.c.l.b16 %v449
    %v1267 = vunpack.c.l.b16 %v450
    %v1268 = vunpack.c.l.b16 %v451
    %v1269 = vunpack.c.l.b16 %v452
    %v1270 = vunpack.c.l.b16 %v453
    %v1271 = vunpack.c.l.b16 %v454
    %v1272 = vunpack.c.l.b16 %v455
    %v1273 = vunpack.c.l.b16 %v456
    %v1274 = vunpack.c.l.b16 %v457
    %v1275 = vunpack.c.l.b16 %v458
    %v1276 = vunpack.c.l.b16 %v459
    %v1277 = vunpack.c.l.b16 %v460
    %v1278 = vunpack.c.l.b16 %v461
    %v1279 = vunpack.c.l.b16 %v462
    %v1280 = vunpack.c.l.b16 %v463
    %v1281 = vunpack.c.l.b16 %v464
    %v1282 = vpack.c.b16 %v1155, %v1154
    %v1283 = vpack.c.b16 %v1157, %v1156
    %v1284 = vpack.c.b16 %v1159, %v1158
    %v1285 = vpack.c.b16 %v1161, %v1160
    %v1286 = vpack.c.b16 %v1163, %v1162
    %v1287 = vpack.c.b16 %v1165, %v1164
    %v1288 = vpack.c.b16 %v1167, %v1166
    %v1289 = vpack.c.b16 %v1169, %v1168
    %v1290 = vpack.c.b16 %v1171, %v1170
    %v1291 = vpack.c.b16 %v1173, %v1172
    %v1292 = vpack.c.b16 %v1175, %v1174
    %v1293 = vpack.c.b16 %v1177, %v1176
    %v1294 = vpack.c.b16 %v1179, %v1178
    %v1295 = vpack.c.b16 %v1181, %v1180
    %v1296 = vpack.c.b16 %v1183, %v1182
    %v1297 = vpack.c.b16 %v1185, %v1184
    %v1298 = vpack.c.b16 %v1187, %v1186
    %v1299 = vpack.c.b16 %v1189, %v1188
    %v1300 = vpack.c.b16 %v1191, %v1190
    %v1301 = vpack.c.b16 %v1193, %v1192
    %v1302 = vpack.c.b16 %v1195, %v1194
    %v1303 = vpack.c.b16 %v1197, %v1196
    %v1304 = vpack.c.b16 %v1199, %v1198
    %v1305 = vpack.c.b16 %v1201, %v1200
    %v1306 = vpack.c.b16 %v1203, %v1202
    %v1307 = vpack.c.b16 %v1205, %v1204
    %v1308 = vpack.c.b16 %v1207, %v1206
    %v1309 = vpack.c.b16 %v1209, %v1208
    %v1310 = vpack.c.b16 %v1211, %v1210
    %v1311 = vpack.c.b16 %v1213, %v1212
    %v1312 = vpack.c.b16 %v1215, %v1214
    %v1313 = vpack.c.b16 %v1217, %v1216
    %v1314 = vpack.c.b16 %v1219, %v1218
    %v1315 = vpack.c.b16 %v1221, %v1220
    %v1316 = vpack.c.b16 %v1223, %v1222
    %v1317 = vpack.c.b16 %v1225, %v1224
    %v1318 = vpack.c.b16 %v1227, %v1226
    %v1319 = vpack.c.b16 %v1229, %v1228
    %v1320 = vpack.c.b16 %v1231, %v1230
    %v1321 = vpack.c.b16 %v1233, %v1232
    %v1322 = vpack.c.b16 %v1235, %v1234
    %v1323 = vpack.c.b16 %v1237, %v1236
    %v1324 = vpack.c.b16 %v1239, %v1238
    %v1325 = vpack.c.b16 %v1241, %v1240
    %v1326 = vpack.c.b16 %v1243, %v1242
    %v1327 = vpack.c.b16 %v1245, %v1244
    %v1328 = vpack.c.b16 %v1247, %v1246
    %v1329 = vpack.c.b16 %v1249, %v1248
    %v1330 = vpack.c.b16 %v1251, %v1250
    %v1331 = vpack.c.b16 %v1253, %v1252
    %v1332 = vpack.c.b16 %v1255, %v1254
    %v1333 = vpack.c.b16 %v1257, %v1256
    %v1334 = vpack.c.b16 %v1259, %v1258
    %v1335 = vpack.c.b16 %v1261, %v1260
    %v1336 = vpack.c.b16 %v1263, %v1262
    %v1337 = vpack.c.b16 %v1265, %v1264
    %v1338 = vpack.c.b16 %v1267, %v1266
    %v1339 = vpack.c.b16 %v1269, %v1268
    %v1340 = vpack.c.b16 %v1271, %v1270
    %v1341 = vpack.c.b16 %v1273, %v1272
    %v1342 = vpack.c.b16 %v1275, %v1274
    %v1343 = vpack.c.b16 %v1277, %v1276
    %v1344 = vpack.c.b16 %v1279, %v1278
    %v1345 = vpack.c.b16 %v1281, %v1280
    %1410 = vmatprep.subr.bf16.mxu0 0
    %1411 = vmatpush1.bf16.msra.mxu0 %v1282
    %1412 = vmatprep.subr.bf16.mxu0 0
    %1413 = vmatpush1.bf16.msra.mxu0 %v1283
    %1414 = vmatprep.subr.bf16.mxu0 0
    %1415 = vmatpush1.bf16.msra.mxu0 %v1284
    %1416 = vmatprep.subr.bf16.mxu0 0
    %1417 = vmatpush1.bf16.msra.mxu0 %v1285
    %1418 = vmatprep.subr.bf16.mxu0 0
    %1419 = vmatpush1.bf16.msra.mxu0 %v1286
    %1420 = vmatprep.subr.bf16.mxu0 0
    %1421 = vmatpush1.bf16.msra.mxu0 %v1287
    %1422 = vmatprep.subr.bf16.mxu0 0
    %1423 = vmatpush1.bf16.msra.mxu0 %v1288
    %1424 = vmatprep.subr.bf16.mxu0 0
    %1425 = vmatpush1.bf16.msra.mxu0 %v1289
    %1426 = vmatprep.subr.bf16.mxu0 0
    %1427 = vmatpush1.bf16.msra.mxu0 %v1290
    %1428 = vmatprep.subr.bf16.mxu0 0
    %1429 = vmatpush1.bf16.msra.mxu0 %v1291
    %1430 = vmatprep.subr.bf16.mxu0 0
    %1431 = vmatpush1.bf16.msra.mxu0 %v1292
    %1432 = vmatprep.subr.bf16.mxu0 0
    %1433 = vmatpush1.bf16.msra.mxu0 %v1293
    %1434 = vmatprep.subr.bf16.mxu0 0
    %1435 = vmatpush1.bf16.msra.mxu0 %v1294
    %1436 = vmatprep.subr.bf16.mxu0 0
    %1437 = vmatpush1.bf16.msra.mxu0 %v1295
    %1438 = vmatprep.subr.bf16.mxu0 0
    %1439 = vmatpush1.bf16.msra.mxu0 %v1296
    %1440 = vmatprep.subr.bf16.mxu0 0
    %1441 = vmatpush1.bf16.msra.mxu0 %v1297
    %1442 = vmatprep.mubr.bf16.mxu0 %v329
    %1443 = vmatmul.mubr.bf16.gmra.mrb[0].mxu0 %v328
    %v1444 = vpop.f32.mrb[0].mxu0
    %v1445 = vadd.f32 %v1024, %v1444
    %v1446 = vpop.f32.mrb[0].mxu0
    %v1447 = vpop.f32.mrb[0].mxu0
    %v1448 = vpop.f32.mrb[0].mxu0
    %1449 = vdwg.mxu0
    %1450 = vmatprep.subr.bf16.mxu0 0
    %1451 = vmatpush1.bf16.msra.mxu0 %v1298
    %1452 = vmatprep.subr.bf16.mxu0 0
    %1453 = vmatpush1.bf16.msra.mxu0 %v1299
    %1454 = vmatprep.subr.bf16.mxu0 0
    %1455 = vmatpush1.bf16.msra.mxu0 %v1300
    %1456 = vmatprep.subr.bf16.mxu0 0
    %1457 = vmatpush1.bf16.msra.mxu0 %v1301
    %1458 = vmatprep.subr.bf16.mxu0 0
    %1459 = vmatpush1.bf16.msra.mxu0 %v1302
    %1460 = vmatprep.subr.bf16.mxu0 0
    %1461 = vmatpush1.bf16.msra.mxu0 %v1303
    %1462 = vmatprep.subr.bf16.mxu0 0
    %1463 = vmatpush1.bf16.msra.mxu0 %v1304
    %1464 = vmatprep.subr.bf16.mxu0 0
    %1465 = vmatpush1.bf16.msra.mxu0 %v1305
    %1466 = vmatprep.subr.bf16.mxu0 0
    %1467 = vmatpush1.bf16.msra.mxu0 %v1306
    %1468 = vmatprep.subr.bf16.mxu0 0
    %1469 = vmatpush1.bf16.msra.mxu0 %v1307
    %1470 = vmatprep.subr.bf16.mxu0 0
    %1471 = vmatpush1.bf16.msra.mxu0 %v1308
    %1472 = vmatprep.subr.bf16.mxu0 0
    %1473 = vmatpush1.bf16.msra.mxu0 %v1309
    %1474 = vmatprep.subr.bf16.mxu0 0
    %1475 = vmatpush1.bf16.msra.mxu0 %v1310
    %1476 = vmatprep.subr.bf16.mxu0 0
    %1477 = vmatpush1.bf16.msra.mxu0 %v1311
    %1478 = vmatprep.subr.bf16.mxu0 0
    %1479 = vmatpush1.bf16.msra.mxu0 %v1312
    %1480 = vmatprep.subr.bf16.mxu0 0
    %1481 = vmatpush1.bf16.msra.mxu0 %v1313
    %1482 = vmatprep.mubr.bf16.mxu0 %v331
    %1483 = vmatmul.mubr.bf16.gmra.mrb[0].mxu0 %v330
    %v1484 = vpop.f32.mrb[0].mxu0
    %v1485 = vadd.f32 %v1445, %v1484
    %v1486 = vpop.f32.mrb[0].mxu0
    %v1487 = vpop.f32.mrb[0].mxu0
    %v1488 = vpop.f32.mrb[0].mxu0
    %1489 = vdwg.mxu0
    %1490 = vmatprep.subr.bf16.mxu0 0
    %1491 = vmatpush1.bf16.msra.mxu0 %v1314
    %1492 = vmatprep.subr.bf16.mxu0 0
    %1493 = vmatpush1.bf16.msra.mxu0 %v1315
    %1494 = vmatprep.subr.bf16.mxu0 0
    %1495 = vmatpush1.bf16.msra.mxu0 %v1316
    %1496 = vmatprep.subr.bf16.mxu0 0
    %1497 = vmatpush1.bf16.msra.mxu0 %v1317
    %1498 = vmatprep.subr.bf16.mxu0 0
    %1499 = vmatpush1.bf16.msra.mxu0 %v1318
    %1500 = vmatprep.subr.bf16.mxu0 0
    %1501 = vmatpush1.bf16.msra.mxu0 %v1319
    %1502 = vmatprep.subr.bf16.mxu0 0
    %1503 = vmatpush1.bf16.msra.mxu0 %v1320
    %1504 = vmatprep.subr.bf16.mxu0 0
    %1505 = vmatpush1.bf16.msra.mxu0 %v1321
    %1506 = vmatprep.subr.bf16.mxu0 0
    %1507 = vmatpush1.bf16.msra.mxu0 %v1322
    %1508 = vmatprep.subr.bf16.mxu0 0
    %1509 = vmatpush1.bf16.msra.mxu0 %v1323
    %1510 = vmatprep.subr.bf16.mxu0 0
    %1511 = vmatpush1.bf16.msra.mxu0 %v1324
    %1512 = vmatprep.subr.bf16.mxu0 0
    %1513 = vmatpush1.bf16.msra.mxu0 %v1325
    %1514 = vmatprep.subr.bf16.mxu0 0
    %1515 = vmatpush1.bf16.msra.mxu0 %v1326
    %1516 = vmatprep.subr.bf16.mxu0 0
    %1517 = vmatpush1.bf16.msra.mxu0 %v1327
    %1518 = vmatprep.subr.bf16.mxu0 0
    %1519 = vmatpush1.bf16.msra.mxu0 %v1328
    %1520 = vmatprep.subr.bf16.mxu0 0
    %1521 = vmatpush1.bf16.msra.mxu0 %v1329
    %1522 = vmatprep.mubr.bf16.mxu0 %v333
    %1523 = vmatmul.mubr.bf16.gmra.mrb[0].mxu0 %v332
    %v1524 = vpop.f32.mrb[0].mxu0
    %v1525 = vadd.f32 %v1485, %v1524
    %v1526 = vpop.f32.mrb[0].mxu0
    %v1527 = vpop.f32.mrb[0].mxu0
    %v1528 = vpop.f32.mrb[0].mxu0
    %1529 = vdwg.mxu0
    %1530 = vmatprep.subr.bf16.mxu0 0
    %1531 = vmatpush1.bf16.msra.mxu0 %v1330
    %1532 = vmatprep.subr.bf16.mxu0 0
    %1533 = vmatpush1.bf16.msra.mxu0 %v1331
    %1534 = vmatprep.subr.bf16.mxu0 0
    %1535 = vmatpush1.bf16.msra.mxu0 %v1332
    %1536 = vmatprep.subr.bf16.mxu0 0
    %1537 = vmatpush1.bf16.msra.mxu0 %v1333
    %1538 = vmatprep.subr.bf16.mxu0 0
    %1539 = vmatpush1.bf16.msra.mxu0 %v1334
    %1540 = vmatprep.subr.bf16.mxu0 0
    %1541 = vmatpush1.bf16.msra.mxu0 %v1335
    %1542 = vmatprep.subr.bf16.mxu0 0
    %1543 = vmatpush1.bf16.msra.mxu0 %v1336
    %1544 = vmatprep.subr.bf16.mxu0 0
    %1545 = vmatpush1.bf16.msra.mxu0 %v1337
    %1546 = vmatprep.subr.bf16.mxu0 0
    %1547 = vmatpush1.bf16.msra.mxu0 %v1338
    %1548 = vmatprep.subr.bf16.mxu0 0
    %1549 = vmatpush1.bf16.msra.mxu0 %v1339
    %1550 = vmatprep.subr.bf16.mxu0 0
    %1551 = vmatpush1.bf16.msra.mxu0 %v1340
    %1552 = vmatprep.subr.bf16.mxu0 0
    %1553 = vmatpush1.bf16.msra.mxu0 %v1341
    %1554 = vmatprep.subr.bf16.mxu0 0
    %1555 = vmatpush1.bf16.msra.mxu0 %v1342
    %1556 = vmatprep.subr.bf16.mxu0 0
    %1557 = vmatpush1.bf16.msra.mxu0 %v1343
    %1558 = vmatprep.subr.bf16.mxu0 0
    %1559 = vmatpush1.bf16.msra.mxu0 %v1344
    %1560 = vmatprep.subr.bf16.mxu0 0
    %1561 = vmatpush1.bf16.msra.mxu0 %v1345
    %1562 = vmatprep.mubr.bf16.mxu0 %v335
    %1563 = vmatmul.mubr.bf16.gmra.mrb[0].mxu0 %v334
    %v1564 = vpop.f32.mrb[0].mxu0
    %v1565 = vadd.f32 %v1525, %v1564
    %v1566 = vpop.f32.mrb[0].mxu0
    %v1567 = vpop.f32.mrb[0].mxu0
    %v1568 = vpop.f32.mrb[0].mxu0
    %1569 = vdwg.mxu0
    %v1570 = vmax.f32 %v1565, 0.0
    %v1571 = vpack.c.bf16 %v1570, %v1570
    %v1572 = vld [vmem:[%s4] sm:$0xff]
    %v1573 = vld [vmem:[%s4 + $0x8] sm:$0xff]
    %v1574 = vld [vmem:[%s4 + $0x10] sm:$0xff]
    %v1575 = vld [vmem:[%s4 + $0x18] sm:$0xff]
    %v1576 = vld [vmem:[%s4 + $0x20] sm:$0xff]
    %v1577 = vld [vmem:[%s4 + $0x28] sm:$0xff]
    %v1578 = vld [vmem:[%s4 + $0x30] sm:$0xff]
    %v1579 = vld [vmem:[%s4 + $0x38] sm:$0xff]
    %v1580 = vld [vmem:[%s4 + $0x40] sm:$0xff]
    %v1581 = vld [vmem:[%s4 + $0x48] sm:$0xff]
    %v1582 = vld [vmem:[%s4 + $0x50] sm:$0xff]
    %v1583 = vld [vmem:[%s4 + $0x58] sm:$0xff]
    %v1584 = vld [vmem:[%s4 + $0x60] sm:$0xff]
    %v1585 = vld [vmem:[%s4 + $0x68] sm:$0xff]
    %v1586 = vld [vmem:[%s4 + $0x70] sm:$0xff]
    %v1587 = vld [vmem:[%s4 + $0x78] sm:$0xff]
    %v1588 = vld [vmem:[%s5] sm:$0x3]
    %v1590 = vlaneseq
    %v1591 = vshrl.u32 %v1590, 7
    %v1592 = vsub.s32 0, %v1591
    %v1593 = vrot.slane %v1588, %v1592
    %v1594 = vlaneseq
    %v1595 = vshrl.u32 %v1594, 7
    %v1596 = vsub.s32 1, %v1595
    %v1597 = vrot.slane %v1588, %v1596
    %v1616 = vunpack.c.l.b16 %v1572
    %v1617 = vunpack.c.h.b16 %v1572
    %v1618 = vunpack.c.l.b16 %v1573
    %v1619 = vunpack.c.h.b16 %v1573
    %v1620 = vunpack.c.l.b16 %v1574
    %v1621 = vunpack.c.h.b16 %v1574
    %v1622 = vunpack.c.l.b16 %v1575
    %v1623 = vunpack.c.h.b16 %v1575
    %v1624 = vunpack.c.l.b16 %v1576
    %v1625 = vunpack.c.h.b16 %v1576
    %v1626 = vunpack.c.l.b16 %v1577
    %v1627 = vunpack.c.h.b16 %v1577
    %v1628 = vunpack.c.l.b16 %v1578
    %v1629 = vunpack.c.h.b16 %v1578
    %v1630 = vunpack.c.l.b16 %v1579
    %v1631 = vunpack.c.h.b16 %v1579
    %v1632 = vunpack.c.l.b16 %v1580
    %v1633 = vunpack.c.h.b16 %v1580
    %v1634 = vunpack.c.l.b16 %v1581
    %v1635 = vunpack.c.h.b16 %v1581
    %v1636 = vunpack.c.l.b16 %v1582
    %v1637 = vunpack.c.h.b16 %v1582
    %v1638 = vunpack.c.l.b16 %v1583
    %v1639 = vunpack.c.h.b16 %v1583
    %v1640 = vunpack.c.l.b16 %v1584
    %v1641 = vunpack.c.h.b16 %v1584
    %v1642 = vunpack.c.l.b16 %v1585
    %v1643 = vunpack.c.h.b16 %v1585
    %v1644 = vunpack.c.l.b16 %v1586
    %v1645 = vunpack.c.h.b16 %v1586
    %v1646 = vunpack.c.l.b16 %v1587
    %v1647 = vunpack.c.h.b16 %v1587
    %v1648 = vpack.c.b16 %v1618, %v1616
    %v1649 = vpack.c.b16 %v1619, %v1617
    %v1650 = vpack.c.b16 %v1622, %v1620
    %v1651 = vpack.c.b16 %v1623, %v1621
    %v1652 = vpack.c.b16 %v1626, %v1624
    %v1653 = vpack.c.b16 %v1627, %v1625
    %v1654 = vpack.c.b16 %v1630, %v1628
    %v1655 = vpack.c.b16 %v1631, %v1629
    %v1656 = vpack.c.b16 %v1634, %v1632
    %v1657 = vpack.c.b16 %v1635, %v1633
    %v1658 = vpack.c.b16 %v1638, %v1636
    %v1659 = vpack.c.b16 %v1639, %v1637
    %v1660 = vpack.c.b16 %v1642, %v1640
    %v1661 = vpack.c.b16 %v1643, %v1641
    %v1662 = vpack.c.b16 %v1646, %v1644
    %v1663 = vpack.c.b16 %v1647, %v1645
    %1680 = vmatprep.subr.bf16.mxu0 %v1649
    %1681 = vmatpush1.bf16.msra.mxu0 %v1648
    %1682 = vmatprep.subr.bf16.mxu0 %v1651
    %1683 = vmatpush1.bf16.msra.mxu0 %v1650
    %1684 = vmatprep.subr.bf16.mxu0 %v1653
    %1685 = vmatpush1.bf16.msra.mxu0 %v1652
    %1686 = vmatprep.subr.bf16.mxu0 %v1655
    %1687 = vmatpush1.bf16.msra.mxu0 %v1654
    %1688 = vmatprep.subr.bf16.mxu0 %v1657
    %1689 = vmatpush1.bf16.msra.mxu0 %v1656
    %1690 = vmatprep.subr.bf16.mxu0 %v1659
    %1691 = vmatpush1.bf16.msra.mxu0 %v1658
    %1692 = vmatprep.subr.bf16.mxu0 %v1661
    %1693 = vmatpush1.bf16.msra.mxu0 %v1660
    %1694 = vmatprep.subr.bf16.mxu0 %v1663
    %1695 = vmatpush1.bf16.msra.mxu0 %v1662
    %1696 = vmatprep.subr.bf16.mxu0 0
    %1697 = vmatpush1.bf16.msra.mxu0 0
    %1698 = vmatprep.subr.bf16.mxu0 0
    %1699 = vmatpush1.bf16.msra.mxu0 0
    %1700 = vmatprep.subr.bf16.mxu0 0
    %1701 = vmatpush1.bf16.msra.mxu0 0
    %1702 = vmatprep.subr.bf16.mxu0 0
    %1703 = vmatpush1.bf16.msra.mxu0 0
    %1704 = vmatprep.subr.bf16.mxu0 0
    %1705 = vmatpush1.bf16.msra.mxu0 0
    %1706 = vmatprep.subr.bf16.mxu0 0
    %1707 = vmatpush1.bf16.msra.mxu0 0
    %1708 = vmatprep.subr.bf16.mxu0 0
    %1709 = vmatpush1.bf16.msra.mxu0 0
    %1710 = vmatprep.subr.bf16.mxu0 0
    %1711 = vmatpush1.bf16.msra.mxu0 0
    %1712 = vmatprep.mubr.bf16.mxu0 0
    %1713 = vmatmul.mubr.bf16.gmra.mrb[0].mxu0 %v1017
    %v1714 = vpop.f32.mrb[0].mxu0
    %v1715 = vadd.f32 %v1593, %v1714
    %v1716 = vpop.f32.mrb[0].mxu0
    %v1717 = vadd.f32 %v1597, %v1716
    %v1718 = vpop.f32.mrb[0].mxu0
    %v1719 = vpop.f32.mrb[0].mxu0
    %1720 = vdwg.mxu0
    %s1721 = scalar_lea.vmem %s4, 128
    %v1722 = vld [vmem:[%s1721] sm:$0xff]
    %v1723 = vld [vmem:[%s1721 + $0x8] sm:$0xff]
    %v1724 = vld [vmem:[%s1721 + $0x10] sm:$0xff]
    %v1725 = vld [vmem:[%s1721 + $0x18] sm:$0xff]
    %v1726 = vld [vmem:[%s1721 + $0x20] sm:$0xff]
    %v1727 = vld [vmem:[%s1721 + $0x28] sm:$0xff]
    %v1728 = vld [vmem:[%s1721 + $0x30] sm:$0xff]
    %v1729 = vld [vmem:[%s1721 + $0x38] sm:$0xff]
    %v1730 = vld [vmem:[%s1721 + $0x40] sm:$0xff]
    %v1731 = vld [vmem:[%s1721 + $0x48] sm:$0xff]
    %v1732 = vld [vmem:[%s1721 + $0x50] sm:$0xff]
    %v1733 = vld [vmem:[%s1721 + $0x58] sm:$0xff]
    %v1734 = vld [vmem:[%s1721 + $0x60] sm:$0xff]
    %v1735 = vld [vmem:[%s1721 + $0x68] sm:$0xff]
    %v1736 = vld [vmem:[%s1721 + $0x70] sm:$0xff]
    %v1737 = vld [vmem:[%s1721 + $0x78] sm:$0xff]
    %s1738 = scalar_lea.vmem %s5, 2
    %v1739 = vld [vmem:[%s1738] sm:$0x3]
    %v1741 = vlaneseq
    %v1742 = vshrl.u32 %v1741, 7
    %v1743 = vsub.s32 0, %v1742
    %v1744 = vrot.slane %v1739, %v1743
    %v1745 = vlaneseq
    %v1746 = vshrl.u32 %v1745, 7
    %v1747 = vsub.s32 1, %v1746
    %v1748 = vrot.slane %v1739, %v1747
    %v1767 = vunpack.c.l.b16 %v1722
    %v1768 = vunpack.c.h.b16 %v1722
    %v1769 = vunpack.c.l.b16 %v1723
    %v1770 = vunpack.c.h.b16 %v1723
    %v1771 = vunpack.c.l.b16 %v1724
    %v1772 = vunpack.c.h.b16 %v1724
    %v1773 = vunpack.c.l.b16 %v1725
    %v1774 = vunpack.c.h.b16 %v1725
    %v1775 = vunpack.c.l.b16 %v1726
    %v1776 = vunpack.c.h.b16 %v1726
    %v1777 = vunpack.c.l.b16 %v1727
    %v1778 = vunpack.c.h.b16 %v1727
    %v1779 = vunpack.c.l.b16 %v1728
    %v1780 = vunpack.c.h.b16 %v1728
    %v1781 = vunpack.c.l.b16 %v1729
    %v1782 = vunpack.c.h.b16 %v1729
    %v1783 = vunpack.c.l.b16 %v1730
    %v1784 = vunpack.c.h.b16 %v1730
    %v1785 = vunpack.c.l.b16 %v1731
    %v1786 = vunpack.c.h.b16 %v1731
    %v1787 = vunpack.c.l.b16 %v1732
    %v1788 = vunpack.c.h.b16 %v1732
    %v1789 = vunpack.c.l.b16 %v1733
    %v1790 = vunpack.c.h.b16 %v1733
    %v1791 = vunpack.c.l.b16 %v1734
    %v1792 = vunpack.c.h.b16 %v1734
    %v1793 = vunpack.c.l.b16 %v1735
    %v1794 = vunpack.c.h.b16 %v1735
    %v1795 = vunpack.c.l.b16 %v1736
    %v1796 = vunpack.c.h.b16 %v1736
    %v1797 = vunpack.c.l.b16 %v1737
    %v1798 = vunpack.c.h.b16 %v1737
    %v1799 = vpack.c.b16 %v1769, %v1767
    %v1800 = vpack.c.b16 %v1770, %v1768
    %v1801 = vpack.c.b16 %v1773, %v1771
    %v1802 = vpack.c.b16 %v1774, %v1772
    %v1803 = vpack.c.b16 %v1777, %v1775
    %v1804 = vpack.c.b16 %v1778, %v1776
    %v1805 = vpack.c.b16 %v1781, %v1779
    %v1806 = vpack.c.b16 %v1782, %v1780
    %v1807 = vpack.c.b16 %v1785, %v1783
    %v1808 = vpack.c.b16 %v1786, %v1784
    %v1809 = vpack.c.b16 %v1789, %v1787
    %v1810 = vpack.c.b16 %v1790, %v1788
    %v1811 = vpack.c.b16 %v1793, %v1791
    %v1812 = vpack.c.b16 %v1794, %v1792
    %v1813 = vpack.c.b16 %v1797, %v1795
    %v1814 = vpack.c.b16 %v1798, %v1796
    %1831 = vmatprep.subr.bf16.mxu0 %v1800
    %1832 = vmatpush1.bf16.msra.mxu0 %v1799
    %1833 = vmatprep.subr.bf16.mxu0 %v1802
    %1834 = vmatpush1.bf16.msra.mxu0 %v1801
    %1835 = vmatprep.subr.bf16.mxu0 %v1804
    %1836 = vmatpush1.bf16.msra.mxu0 %v1803
    %1837 = vmatprep.subr.bf16.mxu0 %v1806
    %1838 = vmatpush1.bf16.msra.mxu0 %v1805
    %1839 = vmatprep.subr.bf16.mxu0 %v1808
    %1840 = vmatpush1.bf16.msra.mxu0 %v1807
    %1841 = vmatprep.subr.bf16.mxu0 %v1810
    %1842 = vmatpush1.bf16.msra.mxu0 %v1809
    %1843 = vmatprep.subr.bf16.mxu0 %v1812
    %1844 = vmatpush1.bf16.msra.mxu0 %v1811
    %1845 = vmatprep.subr.bf16.mxu0 %v1814
    %1846 = vmatpush1.bf16.msra.mxu0 %v1813
    %1847 = vmatprep.subr.bf16.mxu0 0
    %1848 = vmatpush1.bf16.msra.mxu0 0
    %1849 = vmatprep.subr.bf16.mxu0 0
    %1850 = vmatpush1.bf16.msra.mxu0 0
    %1851 = vmatprep.subr.bf16.mxu0 0
    %1852 = vmatpush1.bf16.msra.mxu0 0
    %1853 = vmatprep.subr.bf16.mxu0 0
    %1854 = vmatpush1.bf16.msra.mxu0 0
    %1855 = vmatprep.subr.bf16.mxu0 0
    %1856 = vmatpush1.bf16.msra.mxu0 0
    %1857 = vmatprep.subr.bf16.mxu0 0
    %1858 = vmatpush1.bf16.msra.mxu0 0
    %1859 = vmatprep.subr.bf16.mxu0 0
    %1860 = vmatpush1.bf16.msra.mxu0 0
    %1861 = vmatprep.subr.bf16.mxu0 0
    %1862 = vmatpush1.bf16.msra.mxu0 0
    %1863 = vmatprep.mubr.bf16.mxu0 0
    %1864 = vmatmul.mubr.bf16.gmra.mrb[0].mxu0 %v1571
    %v1865 = vpop.f32.mrb[0].mxu0
    %v1866 = vadd.f32 %v1744, %v1865
    %v1867 = vpop.f32.mrb[0].mxu0
    %v1868 = vadd.f32 %v1748, %v1867
    %v1869 = vpop.f32.mrb[0].mxu0
    %v1870 = vpop.f32.mrb[0].mxu0
    %1871 = vdwg.mxu0
    %v1872 = vpack.c.bf16 %v1715, %v1715
    %v1873 = vpack.c.bf16 %v1717, %v1717
    %v1874 = vld [vmem:[#allocation5] sm:$0xf]
    %v1875 = vld [vmem:[#allocation5 + $0x4] sm:$0xf]
    %v1876 = vld [vmem:[#allocation5 + $0x8] sm:$0xf]
    %v1877 = vld [vmem:[#allocation5 + $0xc] sm:$0xf]
    %v1878 = vld [vmem:[#allocation5 + $0x10] sm:$0xf]
    %v1879 = vld [vmem:[#allocation5 + $0x14] sm:$0xf]
    %v1880 = vld [vmem:[#allocation5 + $0x18] sm:$0xf]
    %v1881 = vld [vmem:[#allocation5 + $0x1c] sm:$0xf]
    %v1882 = vld [vmem:[#allocation5 + $0x20] sm:$0xf]
    %v1883 = vld [vmem:[#allocation5 + $0x24] sm:$0xf]
    %v1884 = vld [vmem:[#allocation5 + $0x28] sm:$0xf]
    %v1885 = vld [vmem:[#allocation5 + $0x2c] sm:$0xf]
    %v1886 = vld [vmem:[#allocation5 + $0x30] sm:$0xf]
    %v1887 = vld [vmem:[#allocation5 + $0x34] sm:$0xf]
    %v1888 = vld [vmem:[#allocation5 + $0x38] sm:$0xf]
    %v1889 = vld [vmem:[#allocation5 + $0x3c] sm:$0xf]
    %v1890 = vld [vmem:[#allocation5 + $0x40] sm:$0xf]
    %v1891 = vld [vmem:[#allocation5 + $0x44] sm:$0xf]
    %v1892 = vld [vmem:[#allocation5 + $0x48] sm:$0xf]
    %v1893 = vld [vmem:[#allocation5 + $0x4c] sm:$0xf]
    %v1894 = vld [vmem:[#allocation5 + $0x50] sm:$0xf]
    %v1895 = vld [vmem:[#allocation5 + $0x54] sm:$0xf]
    %v1896 = vld [vmem:[#allocation5 + $0x58] sm:$0xf]
    %v1897 = vld [vmem:[#allocation5 + $0x5c] sm:$0xf]
    %v1898 = vld [vmem:[#allocation5 + $0x60] sm:$0xf]
    %v1899 = vld [vmem:[#allocation5 + $0x64] sm:$0xf]
    %v1900 = vld [vmem:[#allocation5 + $0x68] sm:$0xf]
    %v1901 = vld [vmem:[#allocation5 + $0x6c] sm:$0xf]
    %v1902 = vld [vmem:[#allocation5 + $0x70] sm:$0xf]
    %v1903 = vld [vmem:[#allocation5 + $0x74] sm:$0xf]
    %v1904 = vld [vmem:[#allocation5 + $0x78] sm:$0xf]
    %v1905 = vld [vmem:[#allocation5 + $0x7c] sm:$0xf]
    %v1906 = vpack.c.bf16 %v1866, %v1866
    %v1907 = vpack.c.bf16 %v1868, %v1868
    %s1908 = scalar_lea.vmem [#allocation5], 128
    %v1909 = vld [vmem:[%s1908] sm:$0xf]
    %v1910 = vld [vmem:[%s1908 + $0x4] sm:$0xf]
    %v1911 = vld [vmem:[%s1908 + $0x8] sm:$0xf]
    %v1912 = vld [vmem:[%s1908 + $0xc] sm:$0xf]
    %v1913 = vld [vmem:[%s1908 + $0x10] sm:$0xf]
    %v1914 = vld [vmem:[%s1908 + $0x14] sm:$0xf]
    %v1915 = vld [vmem:[%s1908 + $0x18] sm:$0xf]
    %v1916 = vld [vmem:[%s1908 + $0x1c] sm:$0xf]
    %v1917 = vld [vmem:[%s1908 + $0x20] sm:$0xf]
    %v1918 = vld [vmem:[%s1908 + $0x24] sm:$0xf]
    %v1919 = vld [vmem:[%s1908 + $0x28] sm:$0xf]
    %v1920 = vld [vmem:[%s1908 + $0x2c] sm:$0xf]
    %v1921 = vld [vmem:[%s1908 + $0x30] sm:$0xf]
    %v1922 = vld [vmem:[%s1908 + $0x34] sm:$0xf]
    %v1923 = vld [vmem:[%s1908 + $0x38] sm:$0xf]
    %v1924 = vld [vmem:[%s1908 + $0x3c] sm:$0xf]
    %v1925 = vld [vmem:[%s1908 + $0x40] sm:$0xf]
    %v1926 = vld [vmem:[%s1908 + $0x44] sm:$0xf]
    %v1927 = vld [vmem:[%s1908 + $0x48] sm:$0xf]
    %v1928 = vld [vmem:[%s1908 + $0x4c] sm:$0xf]
    %v1929 = vld [vmem:[%s1908 + $0x50] sm:$0xf]
    %v1930 = vld [vmem:[%s1908 + $0x54] sm:$0xf]
    %v1931 = vld [vmem:[%s1908 + $0x58] sm:$0xf]
    %v1932 = vld [vmem:[%s1908 + $0x5c] sm:$0xf]
    %v1933 = vld [vmem:[%s1908 + $0x60] sm:$0xf]
    %v1934 = vld [vmem:[%s1908 + $0x64] sm:$0xf]
    %v1935 = vld [vmem:[%s1908 + $0x68] sm:$0xf]
    %v1936 = vld [vmem:[%s1908 + $0x6c] sm:$0xf]
    %v1937 = vld [vmem:[%s1908 + $0x70] sm:$0xf]
    %v1938 = vld [vmem:[%s1908 + $0x74] sm:$0xf]
    %v1939 = vld [vmem:[%s1908 + $0x78] sm:$0xf]
    %v1940 = vld [vmem:[%s1908 + $0x7c] sm:$0xf]
    %v1973 = vunpack.c.l.b16 %v1909
    %v1974 = vunpack.c.l.b16 %v1910
    %v1975 = vunpack.c.l.b16 %v1911
    %v1976 = vunpack.c.l.b16 %v1912
    %v1977 = vunpack.c.l.b16 %v1913
    %v1978 = vunpack.c.l.b16 %v1914
    %v1979 = vunpack.c.l.b16 %v1915
    %v1980 = vunpack.c.l.b16 %v1916
    %v1981 = vunpack.c.l.b16 %v1917
    %v1982 = vunpack.c.l.b16 %v1918
    %v1983 = vunpack.c.l.b16 %v1919
    %v1984 = vunpack.c.l.b16 %v1920
    %v1985 = vunpack.c.l.b16 %v1921
    %v1986 = vunpack.c.l.b16 %v1922
    %v1987 = vunpack.c.l.b16 %v1923
    %v1988 = vunpack.c.l.b16 %v1924
    %v1989 = vunpack.c.l.b16 %v1925
    %v1990 = vunpack.c.l.b16 %v1926
    %v1991 = vunpack.c.l.b16 %v1927
    %v1992 = vunpack.c.l.b16 %v1928
    %v1993 = vunpack.c.l.b16 %v1929
    %v1994 = vunpack.c.l.b16 %v1930
    %v1995 = vunpack.c.l.b16 %v1931
    %v1996 = vunpack.c.l.b16 %v1932
    %v1997 = vunpack.c.l.b16 %v1933
    %v1998 = vunpack.c.l.b16 %v1934
    %v1999 = vunpack.c.l.b16 %v1935
    %v2000 = vunpack.c.l.b16 %v1936
    %v2001 = vunpack.c.l.b16 %v1937
    %v2002 = vunpack.c.l.b16 %v1938
    %v2003 = vunpack.c.l.b16 %v1939
    %v2004 = vunpack.c.l.b16 %v1940
    %v2005 = vpack.c.b16 %v1974, %v1973
    %v2006 = vpack.c.b16 %v1976, %v1975
    %v2007 = vpack.c.b16 %v1978, %v1977
    %v2008 = vpack.c.b16 %v1980, %v1979
    %v2009 = vpack.c.b16 %v1982, %v1981
    %v2010 = vpack.c.b16 %v1984, %v1983
    %v2011 = vpack.c.b16 %v1986, %v1985
    %v2012 = vpack.c.b16 %v1988, %v1987
    %v2013 = vpack.c.b16 %v1990, %v1989
    %v2014 = vpack.c.b16 %v1992, %v1991
    %v2015 = vpack.c.b16 %v1994, %v1993
    %v2016 = vpack.c.b16 %v1996, %v1995
    %v2017 = vpack.c.b16 %v1998, %v1997
    %v2018 = vpack.c.b16 %v2000, %v1999
    %v2019 = vpack.c.b16 %v2002, %v2001
    %v2020 = vpack.c.b16 %v2004, %v2003
    %2037 = vmatprep.subr.bf16.mxu0 0
    %2038 = vmatpush1.bf16.msra.mxu0 %v2005
    %2039 = vmatprep.subr.bf16.mxu0 0
    %2040 = vmatpush1.bf16.msra.mxu0 %v2006
    %2041 = vmatprep.subr.bf16.mxu0 0
    %2042 = vmatpush1.bf16.msra.mxu0 %v2007
    %2043 = vmatprep.subr.bf16.mxu0 0
    %2044 = vmatpush1.bf16.msra.mxu0 %v2008
    %2045 = vmatprep.subr.bf16.mxu0 0
    %2046 = vmatpush1.bf16.msra.mxu0 %v2009
    %2047 = vmatprep.subr.bf16.mxu0 0
    %2048 = vmatpush1.bf16.msra.mxu0 %v2010
    %2049 = vmatprep.subr.bf16.mxu0 0
    %2050 = vmatpush1.bf16.msra.mxu0 %v2011
    %2051 = vmatprep.subr.bf16.mxu0 0
    %2052 = vmatpush1.bf16.msra.mxu0 %v2012
    %2053 = vmatprep.subr.bf16.mxu0 0
    %2054 = vmatpush1.bf16.msra.mxu0 %v2013
    %2055 = vmatprep.subr.bf16.mxu0 0
    %2056 = vmatpush1.bf16.msra.mxu0 %v2014
    %2057 = vmatprep.subr.bf16.mxu0 0
    %2058 = vmatpush1.bf16.msra.mxu0 %v2015
    %2059 = vmatprep.subr.bf16.mxu0 0
    %2060 = vmatpush1.bf16.msra.mxu0 %v2016
    %2061 = vmatprep.subr.bf16.mxu0 0
    %2062 = vmatpush1.bf16.msra.mxu0 %v2017
    %2063 = vmatprep.subr.bf16.mxu0 0
    %2064 = vmatpush1.bf16.msra.mxu0 %v2018
    %2065 = vmatprep.subr.bf16.mxu0 0
    %2066 = vmatpush1.bf16.msra.mxu0 %v2019
    %2067 = vmatprep.subr.bf16.mxu0 0
    %2068 = vmatpush1.bf16.msra.mxu0 %v2020
    %2069 = vmatprep.mubr.bf16.mxu0 %v1907
    %2070 = vmatmul.mubr.bf16.gmra.mrb[0].mxu0 %v1906
    %v2071 = vpop.f32.mrb[0].mxu0
    %v2072 = vadd.f32 0.0, %v2071
    %v2073 = vpop.f32.mrb[0].mxu0
    %v2074 = vpop.f32.mrb[0].mxu0
    %v2075 = vpop.f32.mrb[0].mxu0
    %2076 = vdwg.mxu0
    %v2109 = vunpack.c.l.b16 %v1874
    %v2110 = vunpack.c.l.b16 %v1875
    %v2111 = vunpack.c.l.b16 %v1876
    %v2112 = vunpack.c.l.b16 %v1877
    %v2113 = vunpack.c.l.b16 %v1878
    %v2114 = vunpack.c.l.b16 %v1879
    %v2115 = vunpack.c.l.b16 %v1880
    %v2116 = vunpack.c.l.b16 %v1881
    %v2117 = vunpack.c.l.b16 %v1882
    %v2118 = vunpack.c.l.b16 %v1883
    %v2119 = vunpack.c.l.b16 %v1884
    %v2120 = vunpack.c.l.b16 %v1885
    %v2121 = vunpack.c.l.b16 %v1886
    %v2122 = vunpack.c.l.b16 %v1887
    %v2123 = vunpack.c.l.b16 %v1888
    %v2124 = vunpack.c.l.b16 %v1889
    %v2125 = vunpack.c.l.b16 %v1890
    %v2126 = vunpack.c.l.b16 %v1891
    %v2127 = vunpack.c.l.b16 %v1892
    %v2128 = vunpack.c.l.b16 %v1893
    %v2129 = vunpack.c.l.b16 %v1894
    %v2130 = vunpack.c.l.b16 %v1895
    %v2131 = vunpack.c.l.b16 %v1896
    %v2132 = vunpack.c.l.b16 %v1897
    %v2133 = vunpack.c.l.b16 %v1898
    %v2134 = vunpack.c.l.b16 %v1899
    %v2135 = vunpack.c.l.b16 %v1900
    %v2136 = vunpack.c.l.b16 %v1901
    %v2137 = vunpack.c.l.b16 %v1902
    %v2138 = vunpack.c.l.b16 %v1903
    %v2139 = vunpack.c.l.b16 %v1904
    %v2140 = vunpack.c.l.b16 %v1905
    %v2141 = vpack.c.b16 %v2110, %v2109
    %v2142 = vpack.c.b16 %v2112, %v2111
    %v2143 = vpack.c.b16 %v2114, %v2113
    %v2144 = vpack.c.b16 %v2116, %v2115
    %v2145 = vpack.c.b16 %v2118, %v2117
    %v2146 = vpack.c.b16 %v2120, %v2119
    %v2147 = vpack.c.b16 %v2122, %v2121
    %v2148 = vpack.c.b16 %v2124, %v2123
    %v2149 = vpack.c.b16 %v2126, %v2125
    %v2150 = vpack.c.b16 %v2128, %v2127
    %v2151 = vpack.c.b16 %v2130, %v2129
    %v2152 = vpack.c.b16 %v2132, %v2131
    %v2153 = vpack.c.b16 %v2134, %v2133
    %v2154 = vpack.c.b16 %v2136, %v2135
    %v2155 = vpack.c.b16 %v2138, %v2137
    %v2156 = vpack.c.b16 %v2140, %v2139
    %2173 = vmatprep.subr.bf16.mxu0 0
    %2174 = vmatpush1.bf16.msra.mxu0 %v2141
    %2175 = vmatprep.subr.bf16.mxu0 0
    %2176 = vmatpush1.bf16.msra.mxu0 %v2142
    %2177 = vmatprep.subr.bf16.mxu0 0
    %2178 = vmatpush1.bf16.msra.mxu0 %v2143
    %2179 = vmatprep.subr.bf16.mxu0 0
    %2180 = vmatpush1.bf16.msra.mxu0 %v2144
    %2181 = vmatprep.subr.bf16.mxu0 0
    %2182 = vmatpush1.bf16.msra.mxu0 %v2145
    %2183 = vmatprep.subr.bf16.mxu0 0
    %2184 = vmatpush1.bf16.msra.mxu0 %v2146
    %2185 = vmatprep.subr.bf16.mxu0 0
    %2186 = vmatpush1.bf16.msra.mxu0 %v2147
    %2187 = vmatprep.subr.bf16.mxu0 0
    %2188 = vmatpush1.bf16.msra.mxu0 %v2148
    %2189 = vmatprep.subr.bf16.mxu0 0
    %2190 = vmatpush1.bf16.msra.mxu0 %v2149
    %2191 = vmatprep.subr.bf16.mxu0 0
    %2192 = vmatpush1.bf16.msra.mxu0 %v2150
    %2193 = vmatprep.subr.bf16.mxu0 0
    %2194 = vmatpush1.bf16.msra.mxu0 %v2151
    %2195 = vmatprep.subr.bf16.mxu0 0
    %2196 = vmatpush1.bf16.msra.mxu0 %v2152
    %2197 = vmatprep.subr.bf16.mxu0 0
    %2198 = vmatpush1.bf16.msra.mxu0 %v2153
    %2199 = vmatprep.subr.bf16.mxu0 0
    %2200 = vmatpush1.bf16.msra.mxu0 %v2154
    %2201 = vmatprep.subr.bf16.mxu0 0
    %2202 = vmatpush1.bf16.msra.mxu0 %v2155
    %2203 = vmatprep.subr.bf16.mxu0 0
    %2204 = vmatpush1.bf16.msra.mxu0 %v2156
    %2205 = vmatprep.mubr.bf16.mxu0 %v1873
    %2206 = vmatmul.mubr.bf16.gmra.mrb[0].mxu0 %v1872
    %v2207 = vpop.f32.mrb[0].mxu0
    %v2208 = vadd.f32 %v2072, %v2207
    %v2209 = vpop.f32.mrb[0].mxu0
    %v2210 = vpop.f32.mrb[0].mxu0
    %v2211 = vpop.f32.mrb[0].mxu0
    %2212 = vdwg.mxu0
    %v2213 = vld [vmem:[%s7] sm:$0x1]
    %v2215 = vlaneseq
    %v2216 = vshrl.u32 %v2215, 7
    %v2217 = vsub.s32 0, %v2216
    %v2218 = vrot.slane %v2213, %v2217
    %v2220 = vadd.f32 %v2208, %v2218
    %vm2221 = vcmp.gt.f32.partialorder %v2220, 0.0
    %v2222 = vmul.f32 %v2220, 0.01
    %v2223 = vsel %vm2221, %v2220, %v2222
    %v2224 = vpack.c.bf16 %v2223, %v2223
    %v2225 = vld [vmem:[#allocation7] sm:$0xf]
    %v2226 = vld [vmem:[#allocation7 + $0x4] sm:$0xf]
    %v2227 = vld [vmem:[#allocation7 + $0x8] sm:$0xf]
    %v2228 = vld [vmem:[#allocation7 + $0xc] sm:$0xf]
    %v2229 = vld [vmem:[#allocation7 + $0x10] sm:$0xf]
    %v2230 = vld [vmem:[#allocation7 + $0x14] sm:$0xf]
    %v2231 = vld [vmem:[#allocation7 + $0x18] sm:$0xf]
    %v2232 = vld [vmem:[#allocation7 + $0x1c] sm:$0xf]
    %v2233 = vld [vmem:[#allocation7 + $0x20] sm:$0xf]
    %v2234 = vld [vmem:[#allocation7 + $0x24] sm:$0xf]
    %v2235 = vld [vmem:[#allocation7 + $0x28] sm:$0xf]
    %v2236 = vld [vmem:[#allocation7 + $0x2c] sm:$0xf]
    %v2237 = vld [vmem:[#allocation7 + $0x30] sm:$0xf]
    %v2238 = vld [vmem:[#allocation7 + $0x34] sm:$0xf]
    %v2239 = vld [vmem:[#allocation7 + $0x38] sm:$0xf]
    %v2240 = vld [vmem:[#allocation7 + $0x3c] sm:$0xf]
    %v2241 = vld [vmem:[%s9] sm:$0x1]
    %v2243 = vlaneseq
    %v2244 = vshrl.u32 %v2243, 7
    %v2245 = vsub.s32 0, %v2244
    %v2246 = vrot.slane %v2241, %v2245
    %v2264 = vunpack.c.l.b16 %v2225
    %v2265 = vunpack.c.l.b16 %v2226
    %v2266 = vunpack.c.l.b16 %v2227
    %v2267 = vunpack.c.l.b16 %v2228
    %v2268 = vunpack.c.l.b16 %v2229
    %v2269 = vunpack.c.l.b16 %v2230
    %v2270 = vunpack.c.l.b16 %v2231
    %v2271 = vunpack.c.l.b16 %v2232
    %v2272 = vunpack.c.l.b16 %v2233
    %v2273 = vunpack.c.l.b16 %v2234
    %v2274 = vunpack.c.l.b16 %v2235
    %v2275 = vunpack.c.l.b16 %v2236
    %v2276 = vunpack.c.l.b16 %v2237
    %v2277 = vunpack.c.l.b16 %v2238
    %v2278 = vunpack.c.l.b16 %v2239
    %v2279 = vunpack.c.l.b16 %v2240
    %v2280 = vpack.c.b16 %v2265, %v2264
    %v2281 = vpack.c.b16 %v2267, %v2266
    %v2282 = vpack.c.b16 %v2269, %v2268
    %v2283 = vpack.c.b16 %v2271, %v2270
    %v2284 = vpack.c.b16 %v2273, %v2272
    %v2285 = vpack.c.b16 %v2275, %v2274
    %v2286 = vpack.c.b16 %v2277, %v2276
    %v2287 = vpack.c.b16 %v2279, %v2278
    %2296 = vmatprep.subr.bf16.mxu0 0
    %2297 = vmatpush1.bf16.msra.mxu0 %v2280
    %2298 = vmatprep.subr.bf16.mxu0 0
    %2299 = vmatpush1.bf16.msra.mxu0 %v2281
    %2300 = vmatprep.subr.bf16.mxu0 0
    %2301 = vmatpush1.bf16.msra.mxu0 %v2282
    %2302 = vmatprep.subr.bf16.mxu0 0
    %2303 = vmatpush1.bf16.msra.mxu0 %v2283
    %2304 = vmatprep.subr.bf16.mxu0 0
    %2305 = vmatpush1.bf16.msra.mxu0 %v2284
    %2306 = vmatprep.subr.bf16.mxu0 0
    %2307 = vmatpush1.bf16.msra.mxu0 %v2285
    %2308 = vmatprep.subr.bf16.mxu0 0
    %2309 = vmatpush1.bf16.msra.mxu0 %v2286
    %2310 = vmatprep.subr.bf16.mxu0 0
    %2311 = vmatpush1.bf16.msra.mxu0 %v2287
    %2312 = vmatprep.subr.bf16.mxu0 0
    %2313 = vmatpush1.bf16.msra.mxu0 0
    %2314 = vmatprep.subr.bf16.mxu0 0
    %2315 = vmatpush1.bf16.msra.mxu0 0
    %2316 = vmatprep.subr.bf16.mxu0 0
    %2317 = vmatpush1.bf16.msra.mxu0 0
    %2318 = vmatprep.subr.bf16.mxu0 0
    %2319 = vmatpush1.bf16.msra.mxu0 0
    %2320 = vmatprep.subr.bf16.mxu0 0
    %2321 = vmatpush1.bf16.msra.mxu0 0
    %2322 = vmatprep.subr.bf16.mxu0 0
    %2323 = vmatpush1.bf16.msra.mxu0 0
    %2324 = vmatprep.subr.bf16.mxu0 0
    %2325 = vmatpush1.bf16.msra.mxu0 0
    %2326 = vmatprep.subr.bf16.mxu0 0
    %2327 = vmatpush1.bf16.msra.mxu0 0
    %2328 = vmatprep.mubr.bf16.mxu0 0
    %2329 = vmatmul.mubr.bf16.gmra.mrb[0].mxu0 %v2224
    %v2330 = vpop.f32.mrb[0].mxu0
    %v2331 = vadd.f32 %v2246, %v2330
    %v2332 = vpop.f32.mrb[0].mxu0
    %v2333 = vpop.f32.mrb[0].mxu0
    %v2334 = vpop.f32.mrb[0].mxu0
    %2335 = vdwg.mxu0
    %2336 = vst [vmem:[#allocation8] sm:$0x3] %v2331
    // Predicated region
    $region54: #{_two_images_forward_impl.1} parent=1 // pred_check
      _
    $region55: #{_two_images_forward_impl.1} parent=1 // pred_check_branch
      %2338 = sbr.rel (0) target = $region57
    $region56: #{_two_images_forward_impl.1} parent=1 // pred_region
      %s2340 = ssub.s32 32, 32
      %2341 = vsyncadd [#allocation4], %s2340
      %s2343 = sshll.u32 [#allocation8], 4
      %s2344 = int_to_ptr.vmem [resolvable:$true] %s2343
      %2346 = dma.vmem_to_hbm [thread:$0]  %s2344, 32, %s10, [#allocation4]
    $region57: #{_two_images_forward_impl.1} parent=1 // pred_fallthru
      _
    // Predicated region
    $region58: #{_two_images_forward_impl.1} parent=1 // pred_check
      _
    $region59: #{_two_images_forward_impl.1} parent=1 // pred_check_branch
      %2348 = sbr.rel (0) target = $region61
    $region60: #{_two_images_forward_impl.1} parent=1 // pred_region
      %2349 = dma.done [#allocation4], 32
    $region61: #{_two_images_forward_impl.1} parent=1 // pred_fallthru
      _
    %2350 = vsyncpa [#allocation3], 1
    %2351 = vsyncpa [#allocation6], 1
    %2352 = vsyncpa [#allocation4], 1

</llo_original>
